<compile_context>
chip_gen: v5e
topology: v5e:2x2
jax: 0.10.0
libtpu: 0.0.40
codegen_flags: <defaults>
</compile_context>

<pallas_src>
import functools
import math

import jax
import jax.numpy as jnp
from jax.experimental import pallas as pl
from jax.experimental.pallas import tpu as pltpu

BN_EPS = 1e-5


def _round_up(x, m):
    return ((x + m - 1) // m) * m


# ------------------------------------------------------------------- kernel --
def _mm_fused_kernel(a_ref, b_ref, scale_ref, bias_ref, *rest,
                     apply_relu, add_residual):
    """Tiled (tm,tk)@(tk,tn) on the MXU with fused BN affine / ReLU / residual.

    Grid = (M//tm, N//tn, K//tk); K axis is the reduction ("arbitrary"),
    accumulator lives in f32 VMEM scratch and the epilogue runs on the last
    K step only.
    """
    if add_residual:
        res_ref, o_ref, acc_ref = rest
    else:
        o_ref, acc_ref = rest

    @pl.when(pl.program_id(2) == 0)
    def _():
        acc_ref[...] = jnp.zeros_like(acc_ref)

    acc_ref[...] += jnp.dot(a_ref[...], b_ref[...],
                            preferred_element_type=jnp.float32)

    @pl.when(pl.program_id(2) == pl.num_programs(2) - 1)
    def _():
        y = acc_ref[...] * scale_ref[...] + bias_ref[...]
        if apply_relu:
            y = jnp.maximum(y, 0.0)
        if add_residual:
            y = jnp.maximum(y + res_ref[...], 0.0)
        o_ref[...] = y


# ----------------------------------------------------------- pallas wrapper --
def matmul_bn_act(a, b, scale, bias, *, residual=None, apply_relu=True,
                  add_residual=False):
    """out = epilogue((a @ b) * scale + bias) with optional residual add."""
    M, K = a.shape
    N = b.shape[1]

    # Tile sizes: tm multiple of 16 (bf16 sublane packing), tn/tk multiples
    # of 128 (lane width).  Pad operands so every block is full-size ->
    # unmasked loads/stores and lane-dense (>=128) output tiles.
    tm = min(256, _round_up(M, 16))
    tn = min(256, _round_up(N, 128))
    tk = min(512, _round_up(K, 128))
    Mp, Kp, Np = _round_up(M, tm), _round_up(K, tk), _round_up(N, tn)

    a_p = jnp.pad(a.astype(jnp.bfloat16), ((0, Mp - M), (0, Kp - K)))
    b_p = jnp.pad(b.astype(jnp.bfloat16), ((0, Kp - K), (0, Np - N)))
    scale_p = jnp.pad(scale.astype(jnp.float32), (0, Np - N)).reshape(1, Np)
    bias_p = jnp.pad(bias.astype(jnp.float32), (0, Np - N)).reshape(1, Np)

    in_specs = [
        pl.BlockSpec((tm, tk), lambda i, j, k: (i, k)),
        pl.BlockSpec((tk, tn), lambda i, j, k: (k, j)),
        pl.BlockSpec((1, tn), lambda i, j, k: (0, j)),
        pl.BlockSpec((1, tn), lambda i, j, k: (0, j)),
    ]
    args = [a_p, b_p, scale_p, bias_p]
    if add_residual:
        res_p = jnp.pad(residual.astype(jnp.float32),
                        ((0, Mp - M), (0, Np - N)))
        in_specs.append(pl.BlockSpec((tm, tn), lambda i, j, k: (i, j)))
        args.append(res_p)

    kernel = functools.partial(_mm_fused_kernel, apply_relu=apply_relu,
                               add_residual=add_residual)
    out = pl.pallas_call(
        kernel,
        out_shape=jax.ShapeDtypeStruct((Mp, Np), jnp.float32),
        grid=(Mp // tm, Np // tn, Kp // tk),
        in_specs=in_specs,
        out_specs=pl.BlockSpec((tm, tn), lambda i, j, k: (i, j)),
        scratch_shapes=[pltpu.VMEM((tm, tn), jnp.float32)],
        compiler_params=pltpu.CompilerParams(
            dimension_semantics=("parallel", "parallel", "arbitrary")),
    )(*args)
    return out[:M, :N]


# ------------------------------------------------------------------ conv glue --
def _bn_affine(bn):
    scale = bn['gamma'] * jax.lax.rsqrt(bn['var'] + BN_EPS)
    bias = bn['beta'] - bn['mean'] * scale
    return scale, bias


def conv1x1_bn(x, w, bn, *, stride=1, apply_relu=True, residual=None,
               add_residual=False):
    """1x1 conv (bias-free) + BN (+ReLU) (+fused residual add+ReLU), NHWC."""
    if stride > 1:
        x = x[:, ::stride, ::stride, :]
    n, h, wd, cin = x.shape
    cout = w.shape[0]
    a = x.reshape(n * h * wd, cin)
    b = w.reshape(cout, cin).T
    scale, bias = _bn_affine(bn)
    res = residual.reshape(n * h * wd, cout) if add_residual else None
    out = matmul_bn_act(a, b, scale, bias, residual=res,
                        apply_relu=apply_relu, add_residual=add_residual)
    return out.reshape(n, h, wd, cout)


def conv3x3_bn(x, w, bn, *, stride=1, dilation=1, apply_relu=True):
    """3x3 conv (bias-free, pad=dilation) + BN (+ReLU), NHWC.

    im2col patch extraction is JAX glue; the matmul + BN + ReLU runs in the
    tiled Pallas kernel.
    """
    # TODO(synk): groups > 1 (grouped conv) is not implemented; reference
    # default is groups=1.
    cout, cin, kh, kw = w.shape
    n, h, wd, _ = x.shape
    pad = dilation
    ho = (h + 2 * pad - dilation * (kh - 1) - 1) // stride + 1
    wo = (wd + 2 * pad - dilation * (kw - 1) - 1) // stride + 1
    xp = jnp.pad(x, ((0, 0), (pad, pad), (pad, pad), (0, 0)))
    taps = []
    for i in range(kh):
        for j in range(kw):
            oi, oj = i * dilation, j * dilation
            taps.append(xp[:, oi:oi + (ho - 1) * stride + 1:stride,
                              oj:oj + (wo - 1) * stride + 1:stride, :])
    cols = jnp.stack(taps, axis=3).reshape(n * ho * wo, kh * kw * cin)
    w2 = jnp.transpose(w, (2, 3, 1, 0)).reshape(kh * kw * cin, cout)
    scale, bias = _bn_affine(bn)
    out = matmul_bn_act(cols, w2, scale, bias, apply_relu=apply_relu)
    return out.reshape(n, ho, wo, cout)


# --------------------------------------------------------------- the module --
def bottleneck_forward(params, x_nchw):
    """Bottleneck forward.  Accepts/returns NCHW (PyTorch convention)."""
    x = jnp.transpose(x_nchw, (0, 2, 3, 1)).astype(jnp.float32)   # -> NHWC

    out = conv1x1_bn(x, params['conv1_w'], params['bn1'],
                     stride=1, apply_relu=True)
    out = conv3x3_bn(out, params['conv2_w'], params['bn2'],
                     stride=params['stride'], dilation=params['dilation'],
                     apply_relu=True)

    if 'down_w' in params:   # downsample = conv1x1(stride) + BN (no ReLU)
        identity = conv1x1_bn(x, params['down_w'], params['down_bn'],
                              stride=params['stride'], apply_relu=False)
    else:
        identity = x

    # conv3 + bn3 + relu, then residual add + relu — all fused into one
    # kernel epilogue (reference applies relu(bn3(conv3)) before the add).
    out = conv1x1_bn(out, params['conv3_w'], params['bn3'], stride=1,
                     apply_relu=True, residual=identity, add_residual=True)
    return jnp.transpose(out, (0, 3, 1, 2))   # back to NCHW


# --------------------------------------------------------------- param init --
def _conv_weight(key, cout, cin, k):
    fan_out = cout * k * k                       # kaiming_normal_, fan_out
    std = math.sqrt(2.0 / fan_out)
    return std * jax.random.normal(key, (cout, cin, k, k), jnp.float32)


def _bn(c):
    return dict(gamma=jnp.ones((c,), jnp.float32),
                beta=jnp.zeros((c,), jnp.float32),
                mean=jnp.zeros((c,), jnp.float32),
                var=jnp.ones((c,), jnp.float32))


def init_bottleneck_params(key, inplanes, planes, *, stride=1, groups=1,
                           base_width=64, dilation=1, with_downsample=None):
    expansion = 4
    width = int(planes * (base_width / 64.0)) * groups
    out_planes = planes * expansion
    k1, k2, k3, k4 = jax.random.split(key, 4)
    p = {
        'conv1_w': _conv_weight(k1, width, inplanes, 1),
        'bn1': _bn(width),
        'conv2_w': _conv_weight(k2, width, width // groups, 3),
        'bn2': _bn(width),
        'conv3_w': _conv_weight(k3, out_planes, width, 1),
        'bn3': _bn(out_planes),
        'stride': stride,
        'dilation': dilation,
    }
    if with_downsample is None:
        with_downsample = (stride != 1 or inplanes != out_planes)
    if with_downsample:
        p['down_w'] = _conv_weight(k4, out_planes, inplanes, 1)
        p['down_bn'] = _bn(out_planes)
    return p


if __name__ == "__main__":
    key = jax.random.PRNGKey(0)
    pk, xk = jax.random.split(key)

    # Bottleneck(inplanes=64, planes=32, stride=2) -> width=32, Cout=128,
    # downsample path exercised (stride + channel change).
    inplanes, planes, stride = 64, 32, 2
    params = init_bottleneck_params(pk, inplanes, planes, stride=stride)
    x = jax.random.normal(xk, (2, inplanes, 16, 16), jnp.float32)   # NCHW

    fwd = jax.jit(lambda xx: bottleneck_forward(params, xx))
    y = fwd(x)
    jax.block_until_ready(y)

    assert y.shape == (2, planes * 4, 16 // stride, 16 // stride), y.shape
    assert bool(jnp.all(jnp.isfinite(y)))
    assert bool(jnp.all(y >= 0.0))   # final ReLU
    print("KERNEL_OK")
</pallas_src>

<mosaic_0001>
module attributes {stable_mosaic.version = 11 : i64} {
  func.func @_mm_fused_kernel(%arg0: i32, %arg1: i32, %arg2: i32, %arg3: memref<256x128xbf16, #tpu.memory_space<vmem>>, %arg4: memref<128x128xbf16, #tpu.memory_space<vmem>>, %arg5: memref<1x128xf32, #tpu.memory_space<vmem>>, %arg6: memref<1x128xf32, #tpu.memory_space<vmem>>, %arg7: memref<256x128xf32, #tpu.memory_space<vmem>>, %arg8: memref<256x128xf32, #tpu.memory_space<vmem>>) attributes {dimension_semantics = [#tpu.dimension_semantics<parallel>, #tpu.dimension_semantics<parallel>, #tpu.dimension_semantics<arbitrary>], iteration_bounds = array<i64: 2, 1, 1>, scalar_prefetch = 0 : i64, scratch_operands = 1 : i64, tpu.core_type = #tpu.core_type<tc>, window_params = [{transform_indices = @transform_0, window_bounds = array<i64: 256, 128>}, {transform_indices = @transform_1, window_bounds = array<i64: 128, 128>}, {transform_indices = @transform_2, window_bounds = array<i64: 1, 128>}, {transform_indices = @transform_3, window_bounds = array<i64: 1, 128>}, {transform_indices = @transform_4, window_bounds = array<i64: 256, 128>}]} {
    %c0_i32 = arith.constant 0 : i32
    %0 = arith.cmpi eq, %arg2, %c0_i32 : i32
    %1 = arith.extui %0 : i1 to i32
    %c0_i32_0 = arith.constant 0 : i32
    %2 = arith.cmpi ne, %1, %c0_i32_0 : i32
    scf.if %2 {
      %cst_10 = arith.constant 0.000000e+00 : f32
      %12 = vector.broadcast %cst_10 : f32 to vector<256x128xf32>
      %c0_11 = arith.constant 0 : index
      %c0_12 = arith.constant 0 : index
      %13 = vector.load %arg8[%c0_11, %c0_12] : memref<256x128xf32, #tpu.memory_space<vmem>>, vector<256x128xf32>
      tpu.vector_store %arg8[%c0_11, %c0_12], %12 {strides = array<i32>} : memref<256x128xf32, #tpu.memory_space<vmem>>, vector<256x128xf32>,
    } else {
    }
    %c0 = arith.constant 0 : index
    %c0_1 = arith.constant 0 : index
    %3 = vector.load %arg8[%c0, %c0_1] : memref<256x128xf32, #tpu.memory_space<vmem>>, vector<256x128xf32>
    %c0_2 = arith.constant 0 : index
    %c0_3 = arith.constant 0 : index
    %4 = vector.load %arg3[%c0_2, %c0_3] : memref<256x128xbf16, #tpu.memory_space<vmem>>, vector<256x128xbf16>
    %c0_4 = arith.constant 0 : index
    %c0_5 = arith.constant 0 : index
    %5 = vector.load %arg4[%c0_4, %c0_5] : memref<128x128xbf16, #tpu.memory_space<vmem>>, vector<128x128xbf16>
    %cst = arith.constant dense<0.000000e+00> : vector<256x128xf32>
    %6 = tpu.matmul %4, %5, %cst {dimension_numbers = #tpu.dot_dimension_numbers<[1], [0], [0], [1], [0, 0, 1, 1], [], []>} : vector<256x128xbf16>, vector<128x128xbf16>, vector<256x128xf32> -> vector<256x128xf32>
    %7 = arith.addf %3, %6 : vector<256x128xf32>
    %c0_6 = arith.constant 0 : index
    %c0_7 = arith.constant 0 : index
    %8 = vector.load %arg8[%c0_6, %c0_7] : memref<256x128xf32, #tpu.memory_space<vmem>>, vector<256x128xf32>
    tpu.vector_store %arg8[%c0_6, %c0_7], %7 {strides = array<i32>} : memref<256x128xf32, #tpu.memory_space<vmem>>, vector<256x128xf32>,
    %c0_i32_8 = arith.constant 0 : i32
    %9 = arith.cmpi eq, %arg2, %c0_i32_8 : i32
    %10 = arith.extui %9 : i1 to i32
    %c0_i32_9 = arith.constant 0 : i32
    %11 = arith.cmpi ne, %10, %c0_i32_9 : i32
    scf.if %11 {
      %c0_10 = arith.constant 0 : index
      %c0_11 = arith.constant 0 : index
      %12 = vector.load %arg8[%c0_10, %c0_11] : memref<256x128xf32, #tpu.memory_space<vmem>>, vector<256x128xf32>
      %c0_12 = arith.constant 0 : index
      %c0_13 = arith.constant 0 : index
      %13 = vector.load %arg5[%c0_12, %c0_13] : memref<1x128xf32, #tpu.memory_space<vmem>>, vector<1x128xf32>
      %14 = vector.broadcast %13 : vector<1x128xf32> to vector<256x128xf32>
      %15 = arith.mulf %12, %14 : vector<256x128xf32>
      %c0_14 = arith.constant 0 : index
      %c0_15 = arith.constant 0 : index
      %16 = vector.load %arg6[%c0_14, %c0_15] : memref<1x128xf32, #tpu.memory_space<vmem>>, vector<1x128xf32>
      %17 = vector.broadcast %16 : vector<1x128xf32> to vector<256x128xf32>
      %18 = arith.addf %15, %17 : vector<256x128xf32>
      %cst_16 = arith.constant 0.000000e+00 : f32
      %19 = vector.broadcast %cst_16 : f32 to vector<256x128xf32>
      %20 = arith.maximumf %18, %19 : vector<256x128xf32>
      %c0_17 = arith.constant 0 : index
      %c0_18 = arith.constant 0 : index
      %21 = vector.load %arg7[%c0_17, %c0_18] : memref<256x128xf32, #tpu.memory_space<vmem>>, vector<256x128xf32>
      tpu.vector_store %arg7[%c0_17, %c0_18], %20 {strides = array<i32>} : memref<256x128xf32, #tpu.memory_space<vmem>>, vector<256x128xf32>,
    } else {
    }
    return
  }
  func.func @transform_0(%arg0: i32, %arg1: i32, %arg2: i32) -> (i32, i32) {
    %c0_i32 = arith.constant 0 : i32
    return %arg0, %arg2 : i32, i32
  }
  func.func @transform_1(%arg0: i32, %arg1: i32, %arg2: i32) -> (i32, i32) {
    %c0_i32 = arith.constant 0 : i32
    return %arg2, %arg1 : i32, i32
  }
  func.func @transform_2(%arg0: i32, %arg1: i32, %arg2: i32) -> (i32, i32) {
    %c0_i32 = arith.constant 0 : i32
    %c0_i32_0 = arith.constant 0 : i32
    return %c0_i32, %arg1 : i32, i32
  }
  func.func @transform_3(%arg0: i32, %arg1: i32, %arg2: i32) -> (i32, i32) {
    %c0_i32 = arith.constant 0 : i32
    %c0_i32_0 = arith.constant 0 : i32
    return %c0_i32, %arg1 : i32, i32
  }
  func.func @transform_4(%arg0: i32, %arg1: i32, %arg2: i32) -> (i32, i32) {
    %c0_i32 = arith.constant 0 : i32
    return %arg0, %arg1 : i32, i32
  }
}

module attributes {stable_mosaic.version = 11 : i64} {
  func.func @_mm_fused_kernel(%arg0: i32, %arg1: i32, %arg2: i32, %arg3: memref<128x384xbf16, #tpu.memory_space<vmem>>, %arg4: memref<384x128xbf16, #tpu.memory_space<vmem>>, %arg5: memref<1x128xf32, #tpu.memory_space<vmem>>, %arg6: memref<1x128xf32, #tpu.memory_space<vmem>>, %arg7: memref<128x128xf32, #tpu.memory_space<vmem>>, %arg8: memref<128x128xf32, #tpu.memory_space<vmem>>) attributes {dimension_semantics = [#tpu.dimension_semantics<parallel>, #tpu.dimension_semantics<parallel>, #tpu.dimension_semantics<arbitrary>], iteration_bounds = array<i64: 1, 1, 1>, scalar_prefetch = 0 : i64, scratch_operands = 1 : i64, tpu.core_type = #tpu.core_type<tc>, window_params = [{transform_indices = @transform_0, window_bounds = array<i64: 128, 384>}, {transform_indices = @transform_1, window_bounds = array<i64: 384, 128>}, {transform_indices = @transform_2, window_bounds = array<i64: 1, 128>}, {transform_indices = @transform_3, window_bounds = array<i64: 1, 128>}, {transform_indices = @transform_4, window_bounds = array<i64: 128, 128>}]} {
    %c0_i32 = arith.constant 0 : i32
    %0 = arith.cmpi eq, %arg2, %c0_i32 : i32
    %1 = arith.extui %0 : i1 to i32
    %c0_i32_0 = arith.constant 0 : i32
    %2 = arith.cmpi ne, %1, %c0_i32_0 : i32
    scf.if %2 {
      %cst_10 = arith.constant 0.000000e+00 : f32
      %12 = vector.broadcast %cst_10 : f32 to vector<128x128xf32>
      %c0_11 = arith.constant 0 : index
      %c0_12 = arith.constant 0 : index
      %13 = vector.load %arg8[%c0_11, %c0_12] : memref<128x128xf32, #tpu.memory_space<vmem>>, vector<128x128xf32>
      tpu.vector_store %arg8[%c0_11, %c0_12], %12 {strides = array<i32>} : memref<128x128xf32, #tpu.memory_space<vmem>>, vector<128x128xf32>,
    } else {
    }
    %c0 = arith.constant 0 : index
    %c0_1 = arith.constant 0 : index
    %3 = vector.load %arg8[%c0, %c0_1] : memref<128x128xf32, #tpu.memory_space<vmem>>, vector<128x128xf32>
    %c0_2 = arith.constant 0 : index
    %c0_3 = arith.constant 0 : index
    %4 = vector.load %arg3[%c0_2, %c0_3] : memref<128x384xbf16, #tpu.memory_space<vmem>>, vector<128x384xbf16>
    %c0_4 = arith.constant 0 : index
    %c0_5 = arith.constant 0 : index
    %5 = vector.load %arg4[%c0_4, %c0_5] : memref<384x128xbf16, #tpu.memory_space<vmem>>, vector<384x128xbf16>
    %cst = arith.constant dense<0.000000e+00> : vector<128x128xf32>
    %6 = tpu.matmul %4, %5, %cst {dimension_numbers = #tpu.dot_dimension_numbers<[1], [0], [0], [1], [0, 0, 1, 1], [], []>} : vector<128x384xbf16>, vector<384x128xbf16>, vector<128x128xf32> -> vector<128x128xf32>
    %7 = arith.addf %3, %6 : vector<128x128xf32>
    %c0_6 = arith.constant 0 : index
    %c0_7 = arith.constant 0 : index
    %8 = vector.load %arg8[%c0_6, %c0_7] : memref<128x128xf32, #tpu.memory_space<vmem>>, vector<128x128xf32>
    tpu.vector_store %arg8[%c0_6, %c0_7], %7 {strides = array<i32>} : memref<128x128xf32, #tpu.memory_space<vmem>>, vector<128x128xf32>,
    %c0_i32_8 = arith.constant 0 : i32
    %9 = arith.cmpi eq, %arg2, %c0_i32_8 : i32
    %10 = arith.extui %9 : i1 to i32
    %c0_i32_9 = arith.constant 0 : i32
    %11 = arith.cmpi ne, %10, %c0_i32_9 : i32
    scf.if %11 {
      %c0_10 = arith.constant 0 : index
      %c0_11 = arith.constant 0 : index
      %12 = vector.load %arg8[%c0_10, %c0_11] : memref<128x128xf32, #tpu.memory_space<vmem>>, vector<128x128xf32>
      %c0_12 = arith.constant 0 : index
      %c0_13 = arith.constant 0 : index
      %13 = vector.load %arg5[%c0_12, %c0_13] : memref<1x128xf32, #tpu.memory_space<vmem>>, vector<1x128xf32>
      %14 = vector.broadcast %13 : vector<1x128xf32> to vector<128x128xf32>
      %15 = arith.mulf %12, %14 : vector<128x128xf32>
      %c0_14 = arith.constant 0 : index
      %c0_15 = arith.constant 0 : index
      %16 = vector.load %arg6[%c0_14, %c0_15] : memref<1x128xf32, #tpu.memory_space<vmem>>, vector<1x128xf32>
      %17 = vector.broadcast %16 : vector<1x128xf32> to vector<128x128xf32>
      %18 = arith.addf %15, %17 : vector<128x128xf32>
      %cst_16 = arith.constant 0.000000e+00 : f32
      %19 = vector.broadcast %cst_16 : f32 to vector<128x128xf32>
      %20 = arith.maximumf %18, %19 : vector<128x128xf32>
      %c0_17 = arith.constant 0 : index
      %c0_18 = arith.constant 0 : index
      %21 = vector.load %arg7[%c0_17, %c0_18] : memref<128x128xf32, #tpu.memory_space<vmem>>, vector<128x128xf32>
      tpu.vector_store %arg7[%c0_17, %c0_18], %20 {strides = array<i32>} : memref<128x128xf32, #tpu.memory_space<vmem>>, vector<128x128xf32>,
    } else {
    }
    return
  }
  func.func @transform_0(%arg0: i32, %arg1: i32, %arg2: i32) -> (i32, i32) {
    %c0_i32 = arith.constant 0 : i32
    return %arg0, %arg2 : i32, i32
  }
  func.func @transform_1(%arg0: i32, %arg1: i32, %arg2: i32) -> (i32, i32) {
    %c0_i32 = arith.constant 0 : i32
    return %arg2, %arg1 : i32, i32
  }
  func.func @transform_2(%arg0: i32, %arg1: i32, %arg2: i32) -> (i32, i32) {
    %c0_i32 = arith.constant 0 : i32
    %c0_i32_0 = arith.constant 0 : i32
    return %c0_i32, %arg1 : i32, i32
  }
  func.func @transform_3(%arg0: i32, %arg1: i32, %arg2: i32) -> (i32, i32) {
    %c0_i32 = arith.constant 0 : i32
    %c0_i32_0 = arith.constant 0 : i32
    return %c0_i32, %arg1 : i32, i32
  }
  func.func @transform_4(%arg0: i32, %arg1: i32, %arg2: i32) -> (i32, i32) {
    %c0_i32 = arith.constant 0 : i32
    return %arg0, %arg1 : i32, i32
  }
}

module attributes {stable_mosaic.version = 11 : i64} {
  func.func @_mm_fused_kernel(%arg0: i32, %arg1: i32, %arg2: i32, %arg3: memref<128x128xbf16, #tpu.memory_space<vmem>>, %arg4: memref<128x128xbf16, #tpu.memory_space<vmem>>, %arg5: memref<1x128xf32, #tpu.memory_space<vmem>>, %arg6: memref<1x128xf32, #tpu.memory_space<vmem>>, %arg7: memref<128x128xf32, #tpu.memory_space<vmem>>, %arg8: memref<128x128xf32, #tpu.memory_space<vmem>>, %arg9: memref<128x128xf32, #tpu.memory_space<vmem>>) attributes {dimension_semantics = [#tpu.dimension_semantics<parallel>, #tpu.dimension_semantics<parallel>, #tpu.dimension_semantics<arbitrary>], iteration_bounds = array<i64: 1, 1, 1>, scalar_prefetch = 0 : i64, scratch_operands = 1 : i64, tpu.core_type = #tpu.core_type<tc>, window_params = [{transform_indices = @transform_0, window_bounds = array<i64: 128, 128>}, {transform_indices = @transform_1, window_bounds = array<i64: 128, 128>}, {transform_indices = @transform_2, window_bounds = array<i64: 1, 128>}, {transform_indices = @transform_3, window_bounds = array<i64: 1, 128>}, {transform_indices = @transform_4, window_bounds = array<i64: 128, 128>}, {transform_indices = @transform_5, window_bounds = array<i64: 128, 128>}]} {
    %c0_i32 = arith.constant 0 : i32
    %0 = arith.cmpi eq, %arg2, %c0_i32 : i32
    %1 = arith.extui %0 : i1 to i32
    %c0_i32_0 = arith.constant 0 : i32
    %2 = arith.cmpi ne, %1, %c0_i32_0 : i32
    scf.if %2 {
      %cst_10 = arith.constant 0.000000e+00 : f32
      %12 = vector.broadcast %cst_10 : f32 to vector<128x128xf32>
      %c0_11 = arith.constant 0 : index
      %c0_12 = arith.constant 0 : index
      %13 = vector.load %arg9[%c0_11, %c0_12] : memref<128x128xf32, #tpu.memory_space<vmem>>, vector<128x128xf32>
      tpu.vector_store %arg9[%c0_11, %c0_12], %12 {strides = array<i32>} : memref<128x128xf32, #tpu.memory_space<vmem>>, vector<128x128xf32>,
    } else {
    }
    %c0 = arith.constant 0 : index
    %c0_1 = arith.constant 0 : index
    %3 = vector.load %arg9[%c0, %c0_1] : memref<128x128xf32, #tpu.memory_space<vmem>>, vector<128x128xf32>
    %c0_2 = arith.constant 0 : index
    %c0_3 = arith.constant 0 : index
    %4 = vector.load %arg3[%c0_2, %c0_3] : memref<128x128xbf16, #tpu.memory_space<vmem>>, vector<128x128xbf16>
    %c0_4 = arith.constant 0 : index
    %c0_5 = arith.constant 0 : index
    %5 = vector.load %arg4[%c0_4, %c0_5] : memref<128x128xbf16, #tpu.memory_space<vmem>>, vector<128x128xbf16>
    %cst = arith.constant dense<0.000000e+00> : vector<128x128xf32>
    %6 = tpu.matmul %4, %5, %cst {dimension_numbers = #tpu.dot_dimension_numbers<[1], [0], [0], [1], [0, 0, 1, 1], [], []>} : vector<128x128xbf16>, vector<128x128xbf16>, vector<128x128xf32> -> vector<128x128xf32>
    %7 = arith.addf %3, %6 : vector<128x128xf32>
    %c0_6 = arith.constant 0 : index
    %c0_7 = arith.constant 0 : index
    %8 = vector.load %arg9[%c0_6, %c0_7] : memref<128x128xf32, #tpu.memory_space<vmem>>, vector<128x128xf32>
    tpu.vector_store %arg9[%c0_6, %c0_7], %7 {strides = array<i32>} : memref<128x128xf32, #tpu.memory_space<vmem>>, vector<128x128xf32>,
    %c0_i32_8 = arith.constant 0 : i32
    %9 = arith.cmpi eq, %arg2, %c0_i32_8 : i32
    %10 = arith.extui %9 : i1 to i32
    %c0_i32_9 = arith.constant 0 : i32
    %11 = arith.cmpi ne, %10, %c0_i32_9 : i32
    scf.if %11 {
      %c0_10 = arith.constant 0 : index
      %c0_11 = arith.constant 0 : index
      %12 = vector.load %arg9[%c0_10, %c0_11] : memref<128x128xf32, #tpu.memory_space<vmem>>, vector<128x128xf32>
      %c0_12 = arith.constant 0 : index
      %c0_13 = arith.constant 0 : index
      %13 = vector.load %arg5[%c0_12, %c0_13] : memref<1x128xf32, #tpu.memory_space<vmem>>, vector<1x128xf32>
      %14 = vector.broadcast %13 : vector<1x128xf32> to vector<128x128xf32>
      %15 = arith.mulf %12, %14 : vector<128x128xf32>
      %c0_14 = arith.constant 0 : index
      %c0_15 = arith.constant 0 : index
      %16 = vector.load %arg6[%c0_14, %c0_15] : memref<1x128xf32, #tpu.memory_space<vmem>>, vector<1x128xf32>
      %17 = vector.broadcast %16 : vector<1x128xf32> to vector<128x128xf32>
      %18 = arith.addf %15, %17 : vector<128x128xf32>
      %cst_16 = arith.constant 0.000000e+00 : f32
      %19 = vector.broadcast %cst_16 : f32 to vector<128x128xf32>
      %20 = arith.maximumf %18, %19 : vector<128x128xf32>
      %c0_17 = arith.constant 0 : index
      %c0_18 = arith.constant 0 : index
      %21 = vector.load %arg7[%c0_17, %c0_18] : memref<128x128xf32, #tpu.memory_space<vmem>>, vector<128x128xf32>
      %22 = arith.addf %20, %21 : vector<128x128xf32>
      %cst_19 = arith.constant 0.000000e+00 : f32
      %23 = vector.broadcast %cst_19 : f32 to vector<128x128xf32>
      %24 = arith.maximumf %22, %23 : vector<128x128xf32>
      %c0_20 = arith.constant 0 : index
      %c0_21 = arith.constant 0 : index
      %25 = vector.load %arg8[%c0_20, %c0_21] : memref<128x128xf32, #tpu.memory_space<vmem>>, vector<128x128xf32>
      tpu.vector_store %arg8[%c0_20, %c0_21], %24 {strides = array<i32>} : memref<128x128xf32, #tpu.memory_space<vmem>>, vector<128x128xf32>,
    } else {
    }
    return
  }
  func.func @transform_0(%arg0: i32, %arg1: i32, %arg2: i32) -> (i32, i32) {
    %c0_i32 = arith.constant 0 : i32
    return %arg0, %arg2 : i32, i32
  }
  func.func @transform_1(%arg0: i32, %arg1: i32, %arg2: i32) -> (i32, i32) {
    %c0_i32 = arith.constant 0 : i32
    return %arg2, %arg1 : i32, i32
  }
  func.func @transform_2(%arg0: i32, %arg1: i32, %arg2: i32) -> (i32, i32) {
    %c0_i32 = arith.constant 0 : i32
    %c0_i32_0 = arith.constant 0 : i32
    return %c0_i32, %arg1 : i32, i32
  }
  func.func @transform_3(%arg0: i32, %arg1: i32, %arg2: i32) -> (i32, i32) {
    %c0_i32 = arith.constant 0 : i32
    %c0_i32_0 = arith.constant 0 : i32
    return %c0_i32, %arg1 : i32, i32
  }
  func.func @transform_4(%arg0: i32, %arg1: i32, %arg2: i32) -> (i32, i32) {
    %c0_i32 = arith.constant 0 : i32
    return %arg0, %arg1 : i32, i32
  }
  func.func @transform_5(%arg0: i32, %arg1: i32, %arg2: i32) -> (i32, i32) {
    %c0_i32 = arith.constant 0 : i32
    return %arg0, %arg1 : i32, i32
  }
}

module attributes {stable_mosaic.version = 11 : i64} {
  func.func @_mm_fused_kernel(%arg0: i32, %arg1: i32, %arg2: i32, %arg3: memref<128x128xbf16, #tpu.memory_space<vmem>>, %arg4: memref<128x128xbf16, #tpu.memory_space<vmem>>, %arg5: memref<1x128xf32, #tpu.memory_space<vmem>>, %arg6: memref<1x128xf32, #tpu.memory_space<vmem>>, %arg7: memref<128x128xf32, #tpu.memory_space<vmem>>, %arg8: memref<128x128xf32, #tpu.memory_space<vmem>>) attributes {dimension_semantics = [#tpu.dimension_semantics<parallel>, #tpu.dimension_semantics<parallel>, #tpu.dimension_semantics<arbitrary>], iteration_bounds = array<i64: 1, 1, 1>, scalar_prefetch = 0 : i64, scratch_operands = 1 : i64, tpu.core_type = #tpu.core_type<tc>, window_params = [{transform_indices = @transform_0, window_bounds = array<i64: 128, 128>}, {transform_indices = @transform_1, window_bounds = array<i64: 128, 128>}, {transform_indices = @transform_2, window_bounds = array<i64: 1, 128>}, {transform_indices = @transform_3, window_bounds = array<i64: 1, 128>}, {transform_indices = @transform_4, window_bounds = array<i64: 128, 128>}]} {
    %c0_i32 = arith.constant 0 : i32
    %0 = arith.cmpi eq, %arg2, %c0_i32 : i32
    %1 = arith.extui %0 : i1 to i32
    %c0_i32_0 = arith.constant 0 : i32
    %2 = arith.cmpi ne, %1, %c0_i32_0 : i32
    scf.if %2 {
      %cst_10 = arith.constant 0.000000e+00 : f32
      %12 = vector.broadcast %cst_10 : f32 to vector<128x128xf32>
      %c0_11 = arith.constant 0 : index
      %c0_12 = arith.constant 0 : index
      %13 = vector.load %arg8[%c0_11, %c0_12] : memref<128x128xf32, #tpu.memory_space<vmem>>, vector<128x128xf32>
      tpu.vector_store %arg8[%c0_11, %c0_12], %12 {strides = array<i32>} : memref<128x128xf32, #tpu.memory_space<vmem>>, vector<128x128xf32>,
    } else {
    }
    %c0 = arith.constant 0 : index
    %c0_1 = arith.constant 0 : index
    %3 = vector.load %arg8[%c0, %c0_1] : memref<128x128xf32, #tpu.memory_space<vmem>>, vector<128x128xf32>
    %c0_2 = arith.constant 0 : index
    %c0_3 = arith.constant 0 : index
    %4 = vector.load %arg3[%c0_2, %c0_3] : memref<128x128xbf16, #tpu.memory_space<vmem>>, vector<128x128xbf16>
    %c0_4 = arith.constant 0 : index
    %c0_5 = arith.constant 0 : index
    %5 = vector.load %arg4[%c0_4, %c0_5] : memref<128x128xbf16, #tpu.memory_space<vmem>>, vector<128x128xbf16>
    %cst = arith.constant dense<0.000000e+00> : vector<128x128xf32>
    %6 = tpu.matmul %4, %5, %cst {dimension_numbers = #tpu.dot_dimension_numbers<[1], [0], [0], [1], [0, 0, 1, 1], [], []>} : vector<128x128xbf16>, vector<128x128xbf16>, vector<128x128xf32> -> vector<128x128xf32>
    %7 = arith.addf %3, %6 : vector<128x128xf32>
    %c0_6 = arith.constant 0 : index
    %c0_7 = arith.constant 0 : index
    %8 = vector.load %arg8[%c0_6, %c0_7] : memref<128x128xf32, #tpu.memory_space<vmem>>, vector<128x128xf32>
    tpu.vector_store %arg8[%c0_6, %c0_7], %7 {strides = array<i32>} : memref<128x128xf32, #tpu.memory_space<vmem>>, vector<128x128xf32>,
    %c0_i32_8 = arith.constant 0 : i32
    %9 = arith.cmpi eq, %arg2, %c0_i32_8 : i32
    %10 = arith.extui %9 : i1 to i32
    %c0_i32_9 = arith.constant 0 : i32
    %11 = arith.cmpi ne, %10, %c0_i32_9 : i32
    scf.if %11 {
      %c0_10 = arith.constant 0 : index
      %c0_11 = arith.constant 0 : index
      %12 = vector.load %arg8[%c0_10, %c0_11] : memref<128x128xf32, #tpu.memory_space<vmem>>, vector<128x128xf32>
      %c0_12 = arith.constant 0 : index
      %c0_13 = arith.constant 0 : index
      %13 = vector.load %arg5[%c0_12, %c0_13] : memref<1x128xf32, #tpu.memory_space<vmem>>, vector<1x128xf32>
      %14 = vector.broadcast %13 : vector<1x128xf32> to vector<128x128xf32>
      %15 = arith.mulf %12, %14 : vector<128x128xf32>
      %c0_14 = arith.constant 0 : index
      %c0_15 = arith.constant 0 : index
      %16 = vector.load %arg6[%c0_14, %c0_15] : memref<1x128xf32, #tpu.memory_space<vmem>>, vector<1x128xf32>
      %17 = vector.broadcast %16 : vector<1x128xf32> to vector<128x128xf32>
      %18 = arith.addf %15, %17 : vector<128x128xf32>
      %c0_16 = arith.constant 0 : index
      %c0_17 = arith.constant 0 : index
      %19 = vector.load %arg7[%c0_16, %c0_17] : memref<128x128xf32, #tpu.memory_space<vmem>>, vector<128x128xf32>
      tpu.vector_store %arg7[%c0_16, %c0_17], %18 {strides = array<i32>} : memref<128x128xf32, #tpu.memory_space<vmem>>, vector<128x128xf32>,
    } else {
    }
    return
  }
  func.func @transform_0(%arg0: i32, %arg1: i32, %arg2: i32) -> (i32, i32) {
    %c0_i32 = arith.constant 0 : i32
    return %arg0, %arg2 : i32, i32
  }
  func.func @transform_1(%arg0: i32, %arg1: i32, %arg2: i32) -> (i32, i32) {
    %c0_i32 = arith.constant 0 : i32
    return %arg2, %arg1 : i32, i32
  }
  func.func @transform_2(%arg0: i32, %arg1: i32, %arg2: i32) -> (i32, i32) {
    %c0_i32 = arith.constant 0 : i32
    %c0_i32_0 = arith.constant 0 : i32
    return %c0_i32, %arg1 : i32, i32
  }
  func.func @transform_3(%arg0: i32, %arg1: i32, %arg2: i32) -> (i32, i32) {
    %c0_i32 = arith.constant 0 : i32
    %c0_i32_0 = arith.constant 0 : i32
    return %c0_i32, %arg1 : i32, i32
  }
  func.func @transform_4(%arg0: i32, %arg1: i32, %arg2: i32) -> (i32, i32) {
    %c0_i32 = arith.constant 0 : i32
    return %arg0, %arg1 : i32, i32
  }
}

</mosaic_0001>

<llo_original>
// kernel: _lambda_.4
$region0: #{_lambda_.4}
  #allocation0 [shape = 'u32[]', space=smem, size = 0x4, offset = 0x4, fixed_abs, tag = 'smem constant byte address 0x4 - core index']
  #allocation1 [shape = 'u32[72,128]{1,0:T(1,128)}', space=vmem, size = 0x9000, scoped, tag = 'internal scratch']
  #allocation2 [shape = 'f32[256,128]{1,0:T(8,128)}', space=vmem, size = 0x20000, scoped, tag = 'scratch operand']
  %s0 = inlined_call_operand.vmem [shape: bf16[512,128], index: 0, kind: input, shape index: {}]
  %s1 = inlined_call_operand.vmem [shape: bf16[128,128], index: 1, kind: input, shape index: {}]
  %s2 = inlined_call_operand.vmem [shape: f32[1,128], index: 2, kind: input, shape index: {}]
  %s3 = inlined_call_operand.vmem [shape: f32[1,128], index: 3, kind: input, shape index: {}]
  %s4 = inlined_call_operand.vmem [shape: f32[512,128], index: 4, kind: output, shape index: {}]
  %s5 = sld [smem:[#allocation0]]
  $region57: #{_lambda_.4} parent=0
    _
  %s7 = ssub.s32 1, %s5
  %s8 = scalar_select 0, %s7, %s5
  loop: start=0, step=1, limit=4
  $region2: #{_lambda_.4} parent=0 // loop_pre_header
    _
  $region3: #{_lambda_.4} parent=0 // loop_header
    %s10 = sphi 0, %s14
    %p11 = scmp.ge.s32.totalorder %s10, 4
    %s17 = sphi 0, %s36
    %s18 = sphi 0, %s32
    %s19 = sphi 0, %s28
    %s20 = sphi 0, %s17
    %s21 = sphi 0, %s18
    %s22 = sphi 0, %s19
    %s23 = sphi 0, %s20
    %s24 = sphi 0, %s21
    %s25 = sphi 0, %s22
    %s41 = sphi 0, %s43
    %s44 = sphi 0, %s41
    %s45 = sphi 0, %s44
    %s61 = sphi 0, %s45
    %s69 = sphi 0, %s71
    %s72 = sphi 0, %s69
    %s73 = sphi 0, %s72
    %s89 = sphi 0, %s73
    %s95 = sphi 0, %s97
    %s98 = sphi 0, %s95
    %s99 = sphi 0, %s98
    %s115 = sphi 0, %s99
    %s121 = sphi 0, %s123
    %s124 = sphi 0, %s121
    %s125 = sphi 0, %s124
    %s141 = sphi 0, %s125
    %s149 = sphi 0, %s151
    %s152 = sphi 0, %s149
    %s153 = sphi 0, %s152
    %s169 = sphi 0, %s153
  $region4: #{_lambda_.4} parent=0 // loop_header_branch
    %13 = sbr.rel (%p11) target = $region8
  $region5: #{_lambda_.4} parent=0 // loop_body
    %s15 = ssub.s32 %s10, 1
    %s16 = ssub.s32 %s10, 2
    %s26 = sadd.s32 1, %s19
    %p27 = scmp.ge.s32.totalorder %s26, 1
    %s28 = scalar_select %p27, 0, %s26
    %s29 = sadd.s32 1, %s18
    %s30 = scalar_select %p27, %s29, %s18
    %p31 = scmp.ge.s32.totalorder %s30, 1
    %s32 = scalar_select %p31, 0, %s30
    %s33 = sadd.s32 1, %s17
    %s34 = scalar_select %p31, %s33, %s17
    %p35 = scmp.ge.s32.totalorder %s34, 2
    %s36 = scalar_select %p35, 0, %s34
    %s37 = ssub.s32 %s17, %s36
    %s38 = ssub.s32 %s19, %s28
    %s39 = sor.u32 %s37, %s38
    %p40 = scmp.eq.s32.totalorder %s39, 0
    %s42 = sadd.s32 %s41, 1
    %s43 = scalar_select %p40, %s41, %s42
    %p46 = pneg %p40
    %p47 = scmp.eq.s32.totalorder %s10, 1
    %p48 = por %p46, %p47
    %p49 = scmp.ne.s32.totalorder %s41, %s44
    %p50 = scmp.eq.s32.totalorder %s10, 0
    %p51 = por %p49, %p50
    %p52 = scmp.ne.s32.totalorder %s41, %s44
    %p53 = scmp.eq.s32.totalorder %s15, 1
    %p54 = por %p52, %p53
    %p55 = scmp.ne.s32.totalorder %s44, %s45
    %p56 = scmp.eq.s32.totalorder %s15, 0
    %p57 = por %p55, %p56
    %p58 = scmp.ne.s32.totalorder %s44, %s45
    %p59 = scmp.eq.s32.totalorder %s16, 1
    %p60 = por %p58, %p59
    %p62 = scmp.ne.s32.totalorder %s45, %s61
    %p63 = scmp.eq.s32.totalorder %s16, 0
    %p64 = por %p62, %p63
    %s65 = ssub.s32 %s19, %s28
    %s66 = ssub.s32 %s18, %s32
    %s67 = sor.u32 %s65, %s66
    %p68 = scmp.eq.s32.totalorder %s67, 0
    %s70 = sadd.s32 %s69, 1
    %s71 = scalar_select %p68, %s69, %s70
    %p74 = pneg %p68
    %p75 = scmp.eq.s32.totalorder %s10, 1
    %p76 = por %p74, %p75
    %p77 = scmp.ne.s32.totalorder %s69, %s72
    %p78 = scmp.eq.s32.totalorder %s10, 0
    %p79 = por %p77, %p78
    %p80 = scmp.ne.s32.totalorder %s69, %s72
    %p81 = scmp.eq.s32.totalorder %s15, 1
    %p82 = por %p80, %p81
    %p83 = scmp.ne.s32.totalorder %s72, %s73
    %p84 = scmp.eq.s32.totalorder %s15, 0
    %p85 = por %p83, %p84
    %p86 = scmp.ne.s32.totalorder %s72, %s73
    %p87 = scmp.eq.s32.totalorder %s16, 1
    %p88 = por %p86, %p87
    %p90 = scmp.ne.s32.totalorder %s73, %s89
    %p91 = scmp.eq.s32.totalorder %s16, 0
    %p92 = por %p90, %p91
    %s93 = ssub.s32 %s18, %s32
    %p94 = scmp.eq.s32.totalorder %s93, 0
    %s96 = sadd.s32 %s95, 1
    %s97 = scalar_select %p94, %s95, %s96
    %p100 = pneg %p94
    %p101 = scmp.eq.s32.totalorder %s10, 1
    %p102 = por %p100, %p101
    %p103 = scmp.ne.s32.totalorder %s95, %s98
    %p104 = scmp.eq.s32.totalorder %s10, 0
    %p105 = por %p103, %p104
    %p106 = scmp.ne.s32.totalorder %s95, %s98
    %p107 = scmp.eq.s32.totalorder %s15, 1
    %p108 = por %p106, %p107
    %p109 = scmp.ne.s32.totalorder %s98, %s99
    %p110 = scmp.eq.s32.totalorder %s15, 0
    %p111 = por %p109, %p110
    %p112 = scmp.ne.s32.totalorder %s98, %s99
    %p113 = scmp.eq.s32.totalorder %s16, 1
    %p114 = por %p112, %p113
    %p116 = scmp.ne.s32.totalorder %s99, %s115
    %p117 = scmp.eq.s32.totalorder %s16, 0
    %p118 = por %p116, %p117
    %s119 = ssub.s32 %s18, %s32
    %p120 = scmp.eq.s32.totalorder %s119, 0
    %s122 = sadd.s32 %s121, 1
    %s123 = scalar_select %p120, %s121, %s122
    %p126 = pneg %p120
    %p127 = scmp.eq.s32.totalorder %s10, 1
    %p128 = por %p126, %p127
    %p129 = scmp.ne.s32.totalorder %s121, %s124
    %p130 = scmp.eq.s32.totalorder %s10, 0
    %p131 = por %p129, %p130
    %p132 = scmp.ne.s32.totalorder %s121, %s124
    %p133 = scmp.eq.s32.totalorder %s15, 1
    %p134 = por %p132, %p133
    %p135 = scmp.ne.s32.totalorder %s124, %s125
    %p136 = scmp.eq.s32.totalorder %s15, 0
    %p137 = por %p135, %p136
    %p138 = scmp.ne.s32.totalorder %s124, %s125
    %p139 = scmp.eq.s32.totalorder %s16, 1
    %p140 = por %p138, %p139
    %p142 = scmp.ne.s32.totalorder %s125, %s141
    %p143 = scmp.eq.s32.totalorder %s16, 0
    %p144 = por %p142, %p143
    %s145 = ssub.s32 %s17, %s36
    %s146 = ssub.s32 %s18, %s32
    %s147 = sor.u32 %s145, %s146
    %p148 = scmp.eq.s32.totalorder %s147, 0
    %s150 = sadd.s32 %s149, 1
    %s151 = scalar_select %p148, %s149, %s150
    %p154 = pneg %p148
    %p155 = scmp.eq.s32.totalorder %s10, 1
    %p156 = por %p154, %p155
    %p157 = scmp.ne.s32.totalorder %s149, %s152
    %p158 = scmp.eq.s32.totalorder %s10, 0
    %p159 = por %p157, %p158
    %p160 = scmp.ne.s32.totalorder %s149, %s152
    %p161 = scmp.eq.s32.totalorder %s15, 1
    %p162 = por %p160, %p161
    %p163 = scmp.ne.s32.totalorder %s152, %s153
    %p164 = scmp.eq.s32.totalorder %s15, 0
    %p165 = por %p163, %p164
    %p166 = scmp.ne.s32.totalorder %s152, %s153
    %p167 = scmp.eq.s32.totalorder %s16, 1
    %p168 = por %p166, %p167
    %p170 = scmp.ne.s32.totalorder %s153, %s169
    %p171 = scmp.eq.s32.totalorder %s16, 0
    %p172 = por %p170, %p171
    %p173 = scmp.le.s32.totalorder 1, %s10
    %p174 = scmp.lt.s32.totalorder %s10, 3
    %p175 = pnand %p173, %p174
    %p176 = pneg %p175
    // Predicated region
    $region9: #{_lambda_.4} parent=5 // pred_check
      _
    $region10: #{_lambda_.4} parent=5 // pred_check_branch
      %178 = sbr.rel (%p175) target = $region12
    $region11: #{_lambda_.4} parent=5 // pred_region
      %s179 = ssub.s32 %s10, 1
      // Predicated region
      $region13: #{_lambda_.4} parent=11 // pred_check
        %p180 = pneg %p85
      $region14: #{_lambda_.4} parent=11 // pred_check_branch
        %182 = sbr.rel (%p180) target = $region16
      $region15: #{_lambda_.4} parent=11 // pred_region
        %s183 = smul.u32 16, %s22
        %p184 = scmp.lt.s32.totalorder %s183, 15
        %s185 = scalar_select %p184, %s183, 15
        %p186 = scmp.lt.s32.totalorder %s21, 0
        %s187 = scalar_select %p186, %s21, 0
        %s188 = sadd.s32 %s187, %s185
        %s189 = smul.addr %s188, 4
        %s190 = scalar_lea.vmem %s1, %s189
        %s191 = smul.u32 16, %s22
      $region16: #{_lambda_.4} parent=11 // pred_fallthru
        _
      // Predicated region
      $region17: #{_lambda_.4} parent=11 // pred_check
        %p192 = pneg %p111
      $region18: #{_lambda_.4} parent=11 // pred_check_branch
        %194 = sbr.rel (%p192) target = $region20
      $region19: #{_lambda_.4} parent=11 // pred_region
        %p195 = scmp.lt.s32.totalorder %s21, 0
        %s196 = scalar_select %p195, %s21, 0
        %s197 = scalar_lea.vmem %s2, %s196
      $region20: #{_lambda_.4} parent=11 // pred_fallthru
        _
      // Predicated region
      $region21: #{_lambda_.4} parent=11 // pred_check
        %p198 = pneg %p137
      $region22: #{_lambda_.4} parent=11 // pred_check_branch
        %200 = sbr.rel (%p198) target = $region24
      $region23: #{_lambda_.4} parent=11 // pred_region
        %p201 = scmp.lt.s32.totalorder %s21, 0
        %s202 = scalar_select %p201, %s21, 0
        %s203 = scalar_lea.vmem %s3, %s202
      $region24: #{_lambda_.4} parent=11 // pred_fallthru
        _
    $region12: #{_lambda_.4} parent=5 // pred_fallthru
      _
    %p204 = scmp.lt.s32.totalorder %s10, 2
    // Predicated region
    $region25: #{_lambda_.4} parent=5 // pred_check
      %p205 = pneg %p204
    $region26: #{_lambda_.4} parent=5 // pred_check_branch
      %207 = sbr.rel (%p205) target = $region28
    $region27: #{_lambda_.4} parent=5 // pred_region
      // Predicated region
      $region29: #{_lambda_.4} parent=27 // pred_check
        %p208 = pneg %p51
      $region30: #{_lambda_.4} parent=27 // pred_check_branch
        %210 = sbr.rel (%p208) target = $region32
      $region31: #{_lambda_.4} parent=27 // pred_region
        %s211 = smul.u32 32, %s17
        %p212 = scmp.lt.s32.totalorder %s211, 63
        %s213 = scalar_select %p212, %s211, 63
        %p214 = scmp.lt.s32.totalorder %s19, 0
        %s215 = scalar_select %p214, %s19, 0
        %s216 = sadd.s32 %s215, %s213
        %s217 = smul.addr %s216, 4
        %s218 = scalar_lea.vmem %s0, %s217
        %s219 = smul.u32 32, %s17
      $region32: #{_lambda_.4} parent=27 // pred_fallthru
        _
    $region28: #{_lambda_.4} parent=5 // pred_fallthru
      _
    %p220 = scmp.le.s32.totalorder 1, %s10
    %p221 = scmp.lt.s32.totalorder %s10, 3
    %p222 = pnand %p220, %p221
    %p223 = pneg %p222
    // Predicated region
    $region33: #{_lambda_.4} parent=5 // pred_check
      _
    $region34: #{_lambda_.4} parent=5 // pred_check_branch
      %225 = sbr.rel (%p222) target = $region36
    $region35: #{_lambda_.4} parent=5 // pred_region
      %s226 = ssub.s32 %s10, 1
      %s227 = smul.u32 32, %s20
      %p228 = scmp.lt.s32.totalorder %s227, 63
      %s229 = scalar_select %p228, %s227, 63
      %p230 = scmp.lt.s32.totalorder %s22, 0
      %s231 = scalar_select %p230, %s22, 0
      %s232 = sadd.s32 %s231, %s229
      %s233 = smul.addr %s232, 4
      %s234 = scalar_lea.vmem %s0, %s233
      %p235 = pneg %p57
      %p236 = pneg %p54
      %s237 = smul.u32 16, %s22
      %p238 = scmp.lt.s32.totalorder %s237, 15
      %s239 = scalar_select %p238, %s237, 15
      %p240 = scmp.lt.s32.totalorder %s21, 0
      %s241 = scalar_select %p240, %s21, 0
      %s242 = sadd.s32 %s241, %s239
      %s243 = smul.addr %s242, 4
      %s244 = scalar_lea.vmem %s1, %s243
      %p245 = pneg %p85
      %p246 = pneg %p82
      %p247 = scmp.lt.s32.totalorder %s21, 0
      %s248 = scalar_select %p247, %s21, 0
      %s249 = scalar_lea.vmem %s2, %s248
      %p250 = pneg %p111
      %p251 = pneg %p108
      %p252 = scmp.lt.s32.totalorder %s21, 0
      %s253 = scalar_select %p252, %s21, 0
      %s254 = scalar_lea.vmem %s3, %s253
      %p255 = pneg %p137
      %p256 = pneg %p134
      %p257 = pneg %p165
      %p258 = pneg %p162
      %s259 = smul.u32 32, %s20
      %p260 = scmp.lt.s32.totalorder %s259, 63
      %s261 = scalar_select %p260, %s259, 63
      %p262 = scmp.lt.s32.totalorder %s21, 0
      %s263 = scalar_select %p262, %s21, 0
      %s264 = sadd.s32 %s263, %s261
      %s265 = smul.addr %s264, 8
      %s266 = scalar_lea.vmem %s4, %s265
      %s267 = smul.u32 32, %s20
      %p268 = scmp.lt.s32.totalorder %s267, 63
      %s269 = scalar_select %p268, %s267, 63
      %p270 = scmp.lt.s32.totalorder %s22, 0
      %s271 = scalar_select %p270, %s22, 0
      %s272 = sadd.s32 %s271, %s269
      %s273 = smul.addr %s272, 4
      %s274 = scalar_lea.vmem %s0, %s273
      %s275 = smul.u32 32, %s20
      %s276 = smul.u32 16, %s22
      %p277 = scmp.lt.s32.totalorder %s276, 15
      %s278 = scalar_select %p277, %s276, 15
      %p279 = scmp.lt.s32.totalorder %s21, 0
      %s280 = scalar_select %p279, %s21, 0
      %s281 = sadd.s32 %s280, %s278
      %s282 = smul.addr %s281, 4
      %s283 = scalar_lea.vmem %s1, %s282
      %s284 = smul.u32 16, %s22
      %p285 = scmp.lt.s32.totalorder %s21, 0
      %s286 = scalar_select %p285, %s21, 0
      %s287 = scalar_lea.vmem %s2, %s286
      %p288 = scmp.lt.s32.totalorder %s21, 0
      %s289 = scalar_select %p288, %s21, 0
      %s290 = scalar_lea.vmem %s3, %s289
      %s291 = smul.u32 32, %s20
      %p292 = scmp.lt.s32.totalorder %s291, 63
      %s293 = scalar_select %p292, %s291, 63
      %p294 = scmp.lt.s32.totalorder %s21, 0
      %s295 = scalar_select %p294, %s21, 0
      %s296 = sadd.s32 %s295, %s293
      %s297 = smul.addr %s296, 8
      %s298 = scalar_lea.vmem %s4, %s297
      %s299 = smul.u32 32, %s20
      %p300 = scmp.eq.s32.totalorder %s22, 0
      // Predicated region
      $region37: #{_lambda_.4} parent=35 // pred_check
        %p301 = pneg %p300
      $region38: #{_lambda_.4} parent=35 // pred_check_branch
        %303 = sbr.rel (%p301) target = $region40
      $region39: #{_lambda_.4} parent=35 // pred_region
        %304 = vst [vmem:[#allocation2] sm:$0xff] 0.0
        %305 = vst [vmem:[#allocation2 + $0x8] sm:$0xff] 0.0
        %306 = vst [vmem:[#allocation2 + $0x10] sm:$0xff] 0.0
        %307 = vst [vmem:[#allocation2 + $0x18] sm:$0xff] 0.0
        %308 = vst [vmem:[#allocation2 + $0x20] sm:$0xff] 0.0
        %309 = vst [vmem:[#allocation2 + $0x28] sm:$0xff] 0.0
        %310 = vst [vmem:[#allocation2 + $0x30] sm:$0xff] 0.0
        %311 = vst [vmem:[#allocation2 + $0x38] sm:$0xff] 0.0
        %312 = vst [vmem:[#allocation2 + $0x40] sm:$0xff] 0.0
        %313 = vst [vmem:[#allocation2 + $0x48] sm:$0xff] 0.0
        %314 = vst [vmem:[#allocation2 + $0x50] sm:$0xff] 0.0
        %315 = vst [vmem:[#allocation2 + $0x58] sm:$0xff] 0.0
        %316 = vst [vmem:[#allocation2 + $0x60] sm:$0xff] 0.0
        %317 = vst [vmem:[#allocation2 + $0x68] sm:$0xff] 0.0
        %318 = vst [vmem:[#allocation2 + $0x70] sm:$0xff] 0.0
        %319 = vst [vmem:[#allocation2 + $0x78] sm:$0xff] 0.0
        %320 = vst [vmem:[#allocation2 + $0x80] sm:$0xff] 0.0
        %321 = vst [vmem:[#allocation2 + $0x88] sm:$0xff] 0.0
        %322 = vst [vmem:[#allocation2 + $0x90] sm:$0xff] 0.0
        %323 = vst [vmem:[#allocation2 + $0x98] sm:$0xff] 0.0
        %324 = vst [vmem:[#allocation2 + $0xa0] sm:$0xff] 0.0
        %325 = vst [vmem:[#allocation2 + $0xa8] sm:$0xff] 0.0
        %326 = vst [vmem:[#allocation2 + $0xb0] sm:$0xff] 0.0
        %327 = vst [vmem:[#allocation2 + $0xb8] sm:$0xff] 0.0
        %328 = vst [vmem:[#allocation2 + $0xc0] sm:$0xff] 0.0
        %329 = vst [vmem:[#allocation2 + $0xc8] sm:$0xff] 0.0
        %330 = vst [vmem:[#allocation2 + $0xd0] sm:$0xff] 0.0
        %331 = vst [vmem:[#allocation2 + $0xd8] sm:$0xff] 0.0
        %332 = vst [vmem:[#allocation2 + $0xe0] sm:$0xff] 0.0
        %333 = vst [vmem:[#allocation2 + $0xe8] sm:$0xff] 0.0
        %334 = vst [vmem:[#allocation2 + $0xf0] sm:$0xff] 0.0
        %335 = vst [vmem:[#allocation2 + $0xf8] sm:$0xff] 0.0
      $region40: #{_lambda_.4} parent=35 // pred_fallthru
        _
      %v336 = vld [vmem:[#allocation2] sm:$0xff]
      %v337 = vld [vmem:[#allocation2 + $0x8] sm:$0xff]
      %v338 = vld [vmem:[#allocation2 + $0x10] sm:$0xff]
      %v339 = vld [vmem:[#allocation2 + $0x18] sm:$0xff]
      %v340 = vld [vmem:[#allocation2 + $0x20] sm:$0xff]
      %v341 = vld [vmem:[#allocation2 + $0x28] sm:$0xff]
      %v342 = vld [vmem:[#allocation2 + $0x30] sm:$0xff]
      %v343 = vld [vmem:[#allocation2 + $0x38] sm:$0xff]
      %v344 = vld [vmem:[#allocation2 + $0x40] sm:$0xff]
      %v345 = vld [vmem:[#allocation2 + $0x48] sm:$0xff]
      %v346 = vld [vmem:[#allocation2 + $0x50] sm:$0xff]
      %v347 = vld [vmem:[#allocation2 + $0x58] sm:$0xff]
      %v348 = vld [vmem:[#allocation2 + $0x60] sm:$0xff]
      %v349 = vld [vmem:[#allocation2 + $0x68] sm:$0xff]
      %v350 = vld [vmem:[#allocation2 + $0x70] sm:$0xff]
      %v351 = vld [vmem:[#allocation2 + $0x78] sm:$0xff]
      %v352 = vld [vmem:[#allocation2 + $0x80] sm:$0xff]
      %v353 = vld [vmem:[#allocation2 + $0x88] sm:$0xff]
      %v354 = vld [vmem:[#allocation2 + $0x90] sm:$0xff]
      %v355 = vld [vmem:[#allocation2 + $0x98] sm:$0xff]
      %v356 = vld [vmem:[#allocation2 + $0xa0] sm:$0xff]
      %v357 = vld [vmem:[#allocation2 + $0xa8] sm:$0xff]
      %v358 = vld [vmem:[#allocation2 + $0xb0] sm:$0xff]
      %v359 = vld [vmem:[#allocation2 + $0xb8] sm:$0xff]
      %v360 = vld [vmem:[#allocation2 + $0xc0] sm:$0xff]
      %v361 = vld [vmem:[#allocation2 + $0xc8] sm:$0xff]
      %v362 = vld [vmem:[#allocation2 + $0xd0] sm:$0xff]
      %v363 = vld [vmem:[#allocation2 + $0xd8] sm:$0xff]
      %v364 = vld [vmem:[#allocation2 + $0xe0] sm:$0xff]
      %v365 = vld [vmem:[#allocation2 + $0xe8] sm:$0xff]
      %v366 = vld [vmem:[#allocation2 + $0xf0] sm:$0xff]
      %v367 = vld [vmem:[#allocation2 + $0xf8] sm:$0xff]
      %v368 = vld [vmem:[%s274] sm:$0xf]
      %v369 = vld [vmem:[%s274 + $0x4] sm:$0xf]
      %v370 = vld [vmem:[%s274 + $0x8] sm:$0xf]
      %v371 = vld [vmem:[%s274 + $0xc] sm:$0xf]
      %v372 = vld [vmem:[%s274 + $0x10] sm:$0xf]
      %v373 = vld [vmem:[%s274 + $0x14] sm:$0xf]
      %v374 = vld [vmem:[%s274 + $0x18] sm:$0xf]
      %v375 = vld [vmem:[%s274 + $0x1c] sm:$0xf]
      %v376 = vld [vmem:[%s274 + $0x20] sm:$0xf]
      %v377 = vld [vmem:[%s274 + $0x24] sm:$0xf]
      %v378 = vld [vmem:[%s274 + $0x28] sm:$0xf]
      %v379 = vld [vmem:[%s274 + $0x2c] sm:$0xf]
      %v380 = vld [vmem:[%s274 + $0x30] sm:$0xf]
      %v381 = vld [vmem:[%s274 + $0x34] sm:$0xf]
      %v382 = vld [vmem:[%s274 + $0x38] sm:$0xf]
      %v383 = vld [vmem:[%s274 + $0x3c] sm:$0xf]
      %v384 = vld [vmem:[%s274 + $0x40] sm:$0xf]
      %v385 = vld [vmem:[%s274 + $0x44] sm:$0xf]
      %v386 = vld [vmem:[%s274 + $0x48] sm:$0xf]
      %v387 = vld [vmem:[%s274 + $0x4c] sm:$0xf]
      %v388 = vld [vmem:[%s274 + $0x50] sm:$0xf]
      %v389 = vld [vmem:[%s274 + $0x54] sm:$0xf]
      %v390 = vld [vmem:[%s274 + $0x58] sm:$0xf]
      %v391 = vld [vmem:[%s274 + $0x5c] sm:$0xf]
      %v392 = vld [vmem:[%s274 + $0x60] sm:$0xf]
      %v393 = vld [vmem:[%s274 + $0x64] sm:$0xf]
      %v394 = vld [vmem:[%s274 + $0x68] sm:$0xf]
      %v395 = vld [vmem:[%s274 + $0x6c] sm:$0xf]
      %v396 = vld [vmem:[%s274 + $0x70] sm:$0xf]
      %v397 = vld [vmem:[%s274 + $0x74] sm:$0xf]
      %v398 = vld [vmem:[%s274 + $0x78] sm:$0xf]
      %v399 = vld [vmem:[%s274 + $0x7c] sm:$0xf]
      %v400 = vld [vmem:[%s283] sm:$0xf]
      %v401 = vld [vmem:[%s283 + $0x4] sm:$0xf]
      %v402 = vld [vmem:[%s283 + $0x8] sm:$0xf]
      %v403 = vld [vmem:[%s283 + $0xc] sm:$0xf]
      %v404 = vld [vmem:[%s283 + $0x10] sm:$0xf]
      %v405 = vld [vmem:[%s283 + $0x14] sm:$0xf]
      %v406 = vld [vmem:[%s283 + $0x18] sm:$0xf]
      %v407 = vld [vmem:[%s283 + $0x1c] sm:$0xf]
      %v408 = vld [vmem:[%s283 + $0x20] sm:$0xf]
      %v409 = vld [vmem:[%s283 + $0x24] sm:$0xf]
      %v410 = vld [vmem:[%s283 + $0x28] sm:$0xf]
      %v411 = vld [vmem:[%s283 + $0x2c] sm:$0xf]
      %v412 = vld [vmem:[%s283 + $0x30] sm:$0xf]
      %v413 = vld [vmem:[%s283 + $0x34] sm:$0xf]
      %v414 = vld [vmem:[%s283 + $0x38] sm:$0xf]
      %v415 = vld [vmem:[%s283 + $0x3c] sm:$0xf]
      %v448 = vunpack.c.l.b16 %v368
      %v449 = vunpack.c.l.b16 %v369
      %v450 = vunpack.c.l.b16 %v370
      %v451 = vunpack.c.l.b16 %v371
      %v452 = vunpack.c.l.b16 %v372
      %v453 = vunpack.c.l.b16 %v373
      %v454 = vunpack.c.l.b16 %v374
      %v455 = vunpack.c.l.b16 %v375
      %v456 = vunpack.c.l.b16 %v376
      %v457 = vunpack.c.l.b16 %v377
      %v458 = vunpack.c.l.b16 %v378
      %v459 = vunpack.c.l.b16 %v379
      %v460 = vunpack.c.l.b16 %v380
      %v461 = vunpack.c.l.b16 %v381
      %v462 = vunpack.c.l.b16 %v382
      %v463 = vunpack.c.l.b16 %v383
      %v464 = vunpack.c.l.b16 %v384
      %v465 = vunpack.c.l.b16 %v385
      %v466 = vunpack.c.l.b16 %v386
      %v467 = vunpack.c.l.b16 %v387
      %v468 = vunpack.c.l.b16 %v388
      %v469 = vunpack.c.l.b16 %v389
      %v470 = vunpack.c.l.b16 %v390
      %v471 = vunpack.c.l.b16 %v391
      %v472 = vunpack.c.l.b16 %v392
      %v473 = vunpack.c.l.b16 %v393
      %v474 = vunpack.c.l.b16 %v394
      %v475 = vunpack.c.l.b16 %v395
      %v476 = vunpack.c.l.b16 %v396
      %v477 = vunpack.c.l.b16 %v397
      %v478 = vunpack.c.l.b16 %v398
      %v479 = vunpack.c.l.b16 %v399
      %v480 = vpack.c.b16 %v449, %v448
      %v481 = vpack.c.b16 %v451, %v450
      %v482 = vpack.c.b16 %v453, %v452
      %v483 = vpack.c.b16 %v455, %v454
      %v484 = vpack.c.b16 %v457, %v456
      %v485 = vpack.c.b16 %v459, %v458
      %v486 = vpack.c.b16 %v461, %v460
      %v487 = vpack.c.b16 %v463, %v462
      %v488 = vpack.c.b16 %v465, %v464
      %v489 = vpack.c.b16 %v467, %v466
      %v490 = vpack.c.b16 %v469, %v468
      %v491 = vpack.c.b16 %v471, %v470
      %v492 = vpack.c.b16 %v473, %v472
      %v493 = vpack.c.b16 %v475, %v474
      %v494 = vpack.c.b16 %v477, %v476
      %v495 = vpack.c.b16 %v479, %v478
      %v528 = vunpack.c.l.b16 %v400
      %v529 = vunpack.c.l.b16 %v401
      %v530 = vunpack.c.l.b16 %v402
      %v531 = vunpack.c.l.b16 %v403
      %v532 = vunpack.c.l.b16 %v404
      %v533 = vunpack.c.l.b16 %v405
      %v534 = vunpack.c.l.b16 %v406
      %v535 = vunpack.c.l.b16 %v407
      %v536 = vunpack.c.l.b16 %v408
      %v537 = vunpack.c.l.b16 %v409
      %v538 = vunpack.c.l.b16 %v410
      %v539 = vunpack.c.l.b16 %v411
      %v540 = vunpack.c.l.b16 %v412
      %v541 = vunpack.c.l.b16 %v413
      %v542 = vunpack.c.l.b16 %v414
      %v543 = vunpack.c.l.b16 %v415
      %v544 = vpack.c.b16 %v529, %v528
      %v545 = vpack.c.b16 %v531, %v530
      %v546 = vpack.c.b16 %v533, %v532
      %v547 = vpack.c.b16 %v535, %v534
      %v548 = vpack.c.b16 %v537, %v536
      %v549 = vpack.c.b16 %v539, %v538
      %v550 = vpack.c.b16 %v541, %v540
      %v551 = vpack.c.b16 %v543, %v542
      %560 = vmatpush.bf16.msra.mxu0 %v551
      %561 = vmatpush.bf16.msra.mxu0 %v550
      %562 = vmatpush.bf16.msra.mxu0 %v549
      %563 = vmatpush.bf16.msra.mxu0 %v548
      %564 = vmatpush.bf16.msra.mxu0 %v547
      %565 = vmatpush.bf16.msra.mxu0 %v546
      %566 = vmatpush.bf16.msra.mxu0 %v545
      %567 = vmatpush.bf16.msra.mxu0 %v544
      %568 = vmatmul.bf16.gmra.mxu0 %v480
      %v569 = vpop.f32.mrf.mxu0
      %v570 = vadd.f32 0.0, %v569
      %v571 = vpop.f32.mrf.mxu0
      %v572 = vadd.f32 0.0, %v571
      %573 = vmatmul.bf16.gmra.mxu0 %v481
      %v574 = vpop.f32.mrf.mxu0
      %v575 = vadd.f32 0.0, %v574
      %v576 = vpop.f32.mrf.mxu0
      %v577 = vadd.f32 0.0, %v576
      %578 = vmatmul.bf16.gmra.mxu0 %v482
      %v579 = vpop.f32.mrf.mxu0
      %v580 = vadd.f32 0.0, %v579
      %v581 = vpop.f32.mrf.mxu0
      %v582 = vadd.f32 0.0, %v581
      %583 = vmatmul.bf16.gmra.mxu0 %v483
      %v584 = vpop.f32.mrf.mxu0
      %v585 = vadd.f32 0.0, %v584
      %v586 = vpop.f32.mrf.mxu0
      %v587 = vadd.f32 0.0, %v586
      %588 = vmatmul.bf16.gmra.mxu0 %v484
      %v589 = vpop.f32.mrf.mxu0
      %v590 = vadd.f32 0.0, %v589
      %v591 = vpop.f32.mrf.mxu0
      %v592 = vadd.f32 0.0, %v591
      %593 = vmatmul.bf16.gmra.mxu0 %v485
      %v594 = vpop.f32.mrf.mxu0
      %v595 = vadd.f32 0.0, %v594
      %v596 = vpop.f32.mrf.mxu0
      %v597 = vadd.f32 0.0, %v596
      %598 = vmatmul.bf16.gmra.mxu0 %v486
      %v599 = vpop.f32.mrf.mxu0
      %v600 = vadd.f32 0.0, %v599
      %v601 = vpop.f32.mrf.mxu0
      %v602 = vadd.f32 0.0, %v601
      %603 = vmatmul.bf16.gmra.mxu0 %v487
      %v604 = vpop.f32.mrf.mxu0
      %v605 = vadd.f32 0.0, %v604
      %v606 = vpop.f32.mrf.mxu0
      %v607 = vadd.f32 0.0, %v606
      %608 = vmatmul.bf16.gmra.mxu0 %v488
      %v609 = vpop.f32.mrf.mxu0
      %v610 = vadd.f32 0.0, %v609
      %v611 = vpop.f32.mrf.mxu0
      %v612 = vadd.f32 0.0, %v611
      %613 = vmatmul.bf16.gmra.mxu0 %v489
      %v614 = vpop.f32.mrf.mxu0
      %v615 = vadd.f32 0.0, %v614
      %v616 = vpop.f32.mrf.mxu0
      %v617 = vadd.f32 0.0, %v616
      %618 = vmatmul.bf16.gmra.mxu0 %v490
      %v619 = vpop.f32.mrf.mxu0
      %v620 = vadd.f32 0.0, %v619
      %v621 = vpop.f32.mrf.mxu0
      %v622 = vadd.f32 0.0, %v621
      %623 = vmatmul.bf16.gmra.mxu0 %v491
      %v624 = vpop.f32.mrf.mxu0
      %v625 = vadd.f32 0.0, %v624
      %v626 = vpop.f32.mrf.mxu0
      %v627 = vadd.f32 0.0, %v626
      %628 = vmatmul.bf16.gmra.mxu0 %v492
      %v629 = vpop.f32.mrf.mxu0
      %v630 = vadd.f32 0.0, %v629
      %v631 = vpop.f32.mrf.mxu0
      %v632 = vadd.f32 0.0, %v631
      %633 = vmatmul.bf16.gmra.mxu0 %v493
      %v634 = vpop.f32.mrf.mxu0
      %v635 = vadd.f32 0.0, %v634
      %v636 = vpop.f32.mrf.mxu0
      %v637 = vadd.f32 0.0, %v636
      %638 = vmatmul.bf16.gmra.mxu0 %v494
      %v639 = vpop.f32.mrf.mxu0
      %v640 = vadd.f32 0.0, %v639
      %v641 = vpop.f32.mrf.mxu0
      %v642 = vadd.f32 0.0, %v641
      %643 = vmatmul.bf16.gmra.mxu0 %v495
      %v644 = vpop.f32.mrf.mxu0
      %v645 = vadd.f32 0.0, %v644
      %v646 = vpop.f32.mrf.mxu0
      %v647 = vadd.f32 0.0, %v646
      %648 = vdwg.mxu0
      %v649 = vadd.f32 %v336, %v570
      %v650 = vadd.f32 %v337, %v572
      %v651 = vadd.f32 %v338, %v575
      %v652 = vadd.f32 %v339, %v577
      %v653 = vadd.f32 %v340, %v580
      %v654 = vadd.f32 %v341, %v582
      %v655 = vadd.f32 %v342, %v585
      %v656 = vadd.f32 %v343, %v587
      %v657 = vadd.f32 %v344, %v590
      %v658 = vadd.f32 %v345, %v592
      %v659 = vadd.f32 %v346, %v595
      %v660 = vadd.f32 %v347, %v597
      %v661 = vadd.f32 %v348, %v600
      %v662 = vadd.f32 %v349, %v602
      %v663 = vadd.f32 %v350, %v605
      %v664 = vadd.f32 %v351, %v607
      %v665 = vadd.f32 %v352, %v610
      %v666 = vadd.f32 %v353, %v612
      %v667 = vadd.f32 %v354, %v615
      %v668 = vadd.f32 %v355, %v617
      %v669 = vadd.f32 %v356, %v620
      %v670 = vadd.f32 %v357, %v622
      %v671 = vadd.f32 %v358, %v625
      %v672 = vadd.f32 %v359, %v627
      %v673 = vadd.f32 %v360, %v630
      %v674 = vadd.f32 %v361, %v632
      %v675 = vadd.f32 %v362, %v635
      %v676 = vadd.f32 %v363, %v637
      %v677 = vadd.f32 %v364, %v640
      %v678 = vadd.f32 %v365, %v642
      %v679 = vadd.f32 %v366, %v645
      %v680 = vadd.f32 %v367, %v647
      %681 = vst [vmem:[#allocation2] sm:$0xff] %v649
      %682 = vst [vmem:[#allocation2 + $0x8] sm:$0xff] %v650
      %683 = vst [vmem:[#allocation2 + $0x10] sm:$0xff] %v651
      %684 = vst [vmem:[#allocation2 + $0x18] sm:$0xff] %v652
      %685 = vst [vmem:[#allocation2 + $0x20] sm:$0xff] %v653
      %686 = vst [vmem:[#allocation2 + $0x28] sm:$0xff] %v654
      %687 = vst [vmem:[#allocation2 + $0x30] sm:$0xff] %v655
      %688 = vst [vmem:[#allocation2 + $0x38] sm:$0xff] %v656
      %689 = vst [vmem:[#allocation2 + $0x40] sm:$0xff] %v657
      %690 = vst [vmem:[#allocation2 + $0x48] sm:$0xff] %v658
      %691 = vst [vmem:[#allocation2 + $0x50] sm:$0xff] %v659
      %692 = vst [vmem:[#allocation2 + $0x58] sm:$0xff] %v660
      %693 = vst [vmem:[#allocation2 + $0x60] sm:$0xff] %v661
      %694 = vst [vmem:[#allocation2 + $0x68] sm:$0xff] %v662
      %695 = vst [vmem:[#allocation2 + $0x70] sm:$0xff] %v663
      %696 = vst [vmem:[#allocation2 + $0x78] sm:$0xff] %v664
      %697 = vst [vmem:[#allocation2 + $0x80] sm:$0xff] %v665
      %698 = vst [vmem:[#allocation2 + $0x88] sm:$0xff] %v666
      %699 = vst [vmem:[#allocation2 + $0x90] sm:$0xff] %v667
      %700 = vst [vmem:[#allocation2 + $0x98] sm:$0xff] %v668
      %701 = vst [vmem:[#allocation2 + $0xa0] sm:$0xff] %v669
      %702 = vst [vmem:[#allocation2 + $0xa8] sm:$0xff] %v670
      %703 = vst [vmem:[#allocation2 + $0xb0] sm:$0xff] %v671
      %704 = vst [vmem:[#allocation2 + $0xb8] sm:$0xff] %v672
      %705 = vst [vmem:[#allocation2 + $0xc0] sm:$0xff] %v673
      %706 = vst [vmem:[#allocation2 + $0xc8] sm:$0xff] %v674
      %707 = vst [vmem:[#allocation2 + $0xd0] sm:$0xff] %v675
      %708 = vst [vmem:[#allocation2 + $0xd8] sm:$0xff] %v676
      %709 = vst [vmem:[#allocation2 + $0xe0] sm:$0xff] %v677
      %710 = vst [vmem:[#allocation2 + $0xe8] sm:$0xff] %v678
      %711 = vst [vmem:[#allocation2 + $0xf0] sm:$0xff] %v679
      %712 = vst [vmem:[#allocation2 + $0xf8] sm:$0xff] %v680
      // Predicated region
      $region41: #{_lambda_.4} parent=35 // pred_check
        %p713 = pneg %p300
      $region42: #{_lambda_.4} parent=35 // pred_check_branch
        %715 = sbr.rel (%p713) target = $region44
      $region43: #{_lambda_.4} parent=35 // pred_region
        %v716 = vld [vmem:[#allocation2] sm:$0xff]
        %v717 = vld [vmem:[#allocation2 + $0x8] sm:$0xff]
        %v718 = vld [vmem:[#allocation2 + $0x10] sm:$0xff]
        %v719 = vld [vmem:[#allocation2 + $0x18] sm:$0xff]
        %v720 = vld [vmem:[#allocation2 + $0x20] sm:$0xff]
        %v721 = vld [vmem:[#allocation2 + $0x28] sm:$0xff]
        %v722 = vld [vmem:[#allocation2 + $0x30] sm:$0xff]
        %v723 = vld [vmem:[#allocation2 + $0x38] sm:$0xff]
        %v724 = vld [vmem:[#allocation2 + $0x40] sm:$0xff]
        %v725 = vld [vmem:[#allocation2 + $0x48] sm:$0xff]
        %v726 = vld [vmem:[#allocation2 + $0x50] sm:$0xff]
        %v727 = vld [vmem:[#allocation2 + $0x58] sm:$0xff]
        %v728 = vld [vmem:[#allocation2 + $0x60] sm:$0xff]
        %v729 = vld [vmem:[#allocation2 + $0x68] sm:$0xff]
        %v730 = vld [vmem:[#allocation2 + $0x70] sm:$0xff]
        %v731 = vld [vmem:[#allocation2 + $0x78] sm:$0xff]
        %v732 = vld [vmem:[#allocation2 + $0x80] sm:$0xff]
        %v733 = vld [vmem:[#allocation2 + $0x88] sm:$0xff]
        %v734 = vld [vmem:[#allocation2 + $0x90] sm:$0xff]
        %v735 = vld [vmem:[#allocation2 + $0x98] sm:$0xff]
        %v736 = vld [vmem:[#allocation2 + $0xa0] sm:$0xff]
        %v737 = vld [vmem:[#allocation2 + $0xa8] sm:$0xff]
        %v738 = vld [vmem:[#allocation2 + $0xb0] sm:$0xff]
        %v739 = vld [vmem:[#allocation2 + $0xb8] sm:$0xff]
        %v740 = vld [vmem:[#allocation2 + $0xc0] sm:$0xff]
        %v741 = vld [vmem:[#allocation2 + $0xc8] sm:$0xff]
        %v742 = vld [vmem:[#allocation2 + $0xd0] sm:$0xff]
        %v743 = vld [vmem:[#allocation2 + $0xd8] sm:$0xff]
        %v744 = vld [vmem:[#allocation2 + $0xe0] sm:$0xff]
        %v745 = vld [vmem:[#allocation2 + $0xe8] sm:$0xff]
        %v746 = vld [vmem:[#allocation2 + $0xf0] sm:$0xff]
        %v747 = vld [vmem:[#allocation2 + $0xf8] sm:$0xff]
        %v748 = vld [vmem:[%s287] sm:$0x1]
        %v750 = vperm.slane %v748, 0
        %v752 = vmul.f32 %v716, %v750
        %v753 = vmul.f32 %v717, %v750
        %v754 = vmul.f32 %v718, %v750
        %v755 = vmul.f32 %v719, %v750
        %v756 = vmul.f32 %v720, %v750
        %v757 = vmul.f32 %v721, %v750
        %v758 = vmul.f32 %v722, %v750
        %v759 = vmul.f32 %v723, %v750
        %v760 = vmul.f32 %v724, %v750
        %v761 = vmul.f32 %v725, %v750
        %v762 = vmul.f32 %v726, %v750
        %v763 = vmul.f32 %v727, %v750
        %v764 = vmul.f32 %v728, %v750
        %v765 = vmul.f32 %v729, %v750
        %v766 = vmul.f32 %v730, %v750
        %v767 = vmul.f32 %v731, %v750
        %v768 = vmul.f32 %v732, %v750
        %v769 = vmul.f32 %v733, %v750
        %v770 = vmul.f32 %v734, %v750
        %v771 = vmul.f32 %v735, %v750
        %v772 = vmul.f32 %v736, %v750
        %v773 = vmul.f32 %v737, %v750
        %v774 = vmul.f32 %v738, %v750
        %v775 = vmul.f32 %v739, %v750
        %v776 = vmul.f32 %v740, %v750
        %v777 = vmul.f32 %v741, %v750
        %v778 = vmul.f32 %v742, %v750
        %v779 = vmul.f32 %v743, %v750
        %v780 = vmul.f32 %v744, %v750
        %v781 = vmul.f32 %v745, %v750
        %v782 = vmul.f32 %v746, %v750
        %v783 = vmul.f32 %v747, %v750
        %v784 = vld [vmem:[%s290] sm:$0x1]
        %v786 = vperm.slane %v784, 0
        %v788 = vadd.f32 %v752, %v786
        %v789 = vadd.f32 %v753, %v786
        %v790 = vadd.f32 %v754, %v786
        %v791 = vadd.f32 %v755, %v786
        %v792 = vadd.f32 %v756, %v786
        %v793 = vadd.f32 %v757, %v786
        %v794 = vadd.f32 %v758, %v786
        %v795 = vadd.f32 %v759, %v786
        %v796 = vadd.f32 %v760, %v786
        %v797 = vadd.f32 %v761, %v786
        %v798 = vadd.f32 %v762, %v786
        %v799 = vadd.f32 %v763, %v786
        %v800 = vadd.f32 %v764, %v786
        %v801 = vadd.f32 %v765, %v786
        %v802 = vadd.f32 %v766, %v786
        %v803 = vadd.f32 %v767, %v786
        %v804 = vadd.f32 %v768, %v786
        %v805 = vadd.f32 %v769, %v786
        %v806 = vadd.f32 %v770, %v786
        %v807 = vadd.f32 %v771, %v786
        %v808 = vadd.f32 %v772, %v786
        %v809 = vadd.f32 %v773, %v786
        %v810 = vadd.f32 %v774, %v786
        %v811 = vadd.f32 %v775, %v786
        %v812 = vadd.f32 %v776, %v786
        %v813 = vadd.f32 %v777, %v786
        %v814 = vadd.f32 %v778, %v786
        %v815 = vadd.f32 %v779, %v786
        %v816 = vadd.f32 %v780, %v786
        %v817 = vadd.f32 %v781, %v786
        %v818 = vadd.f32 %v782, %v786
        %v819 = vadd.f32 %v783, %v786
        %v820 = vmax.f32 %v788, 0.0
        %v821 = vmax.f32 %v789, 0.0
        %v822 = vmax.f32 %v790, 0.0
        %v823 = vmax.f32 %v791, 0.0
        %v824 = vmax.f32 %v792, 0.0
        %v825 = vmax.f32 %v793, 0.0
        %v826 = vmax.f32 %v794, 0.0
        %v827 = vmax.f32 %v795, 0.0
        %v828 = vmax.f32 %v796, 0.0
        %v829 = vmax.f32 %v797, 0.0
        %v830 = vmax.f32 %v798, 0.0
        %v831 = vmax.f32 %v799, 0.0
        %v832 = vmax.f32 %v800, 0.0
        %v833 = vmax.f32 %v801, 0.0
        %v834 = vmax.f32 %v802, 0.0
        %v835 = vmax.f32 %v803, 0.0
        %v836 = vmax.f32 %v804, 0.0
        %v837 = vmax.f32 %v805, 0.0
        %v838 = vmax.f32 %v806, 0.0
        %v839 = vmax.f32 %v807, 0.0
        %v840 = vmax.f32 %v808, 0.0
        %v841 = vmax.f32 %v809, 0.0
        %v842 = vmax.f32 %v810, 0.0
        %v843 = vmax.f32 %v811, 0.0
        %v844 = vmax.f32 %v812, 0.0
        %v845 = vmax.f32 %v813, 0.0
        %v846 = vmax.f32 %v814, 0.0
        %v847 = vmax.f32 %v815, 0.0
        %v848 = vmax.f32 %v816, 0.0
        %v849 = vmax.f32 %v817, 0.0
        %v850 = vmax.f32 %v818, 0.0
        %v851 = vmax.f32 %v819, 0.0
        %852 = vst [vmem:[%s298] sm:$0xff] %v820
        %853 = vst [vmem:[%s298 + $0x8] sm:$0xff] %v821
        %854 = vst [vmem:[%s298 + $0x10] sm:$0xff] %v822
        %855 = vst [vmem:[%s298 + $0x18] sm:$0xff] %v823
        %856 = vst [vmem:[%s298 + $0x20] sm:$0xff] %v824
        %857 = vst [vmem:[%s298 + $0x28] sm:$0xff] %v825
        %858 = vst [vmem:[%s298 + $0x30] sm:$0xff] %v826
        %859 = vst [vmem:[%s298 + $0x38] sm:$0xff] %v827
        %860 = vst [vmem:[%s298 + $0x40] sm:$0xff] %v828
        %861 = vst [vmem:[%s298 + $0x48] sm:$0xff] %v829
        %862 = vst [vmem:[%s298 + $0x50] sm:$0xff] %v830
        %863 = vst [vmem:[%s298 + $0x58] sm:$0xff] %v831
        %864 = vst [vmem:[%s298 + $0x60] sm:$0xff] %v832
        %865 = vst [vmem:[%s298 + $0x68] sm:$0xff] %v833
        %866 = vst [vmem:[%s298 + $0x70] sm:$0xff] %v834
        %867 = vst [vmem:[%s298 + $0x78] sm:$0xff] %v835
        %868 = vst [vmem:[%s298 + $0x80] sm:$0xff] %v836
        %869 = vst [vmem:[%s298 + $0x88] sm:$0xff] %v837
        %870 = vst [vmem:[%s298 + $0x90] sm:$0xff] %v838
        %871 = vst [vmem:[%s298 + $0x98] sm:$0xff] %v839
        %872 = vst [vmem:[%s298 + $0xa0] sm:$0xff] %v840
        %873 = vst [vmem:[%s298 + $0xa8] sm:$0xff] %v841
        %874 = vst [vmem:[%s298 + $0xb0] sm:$0xff] %v842
        %875 = vst [vmem:[%s298 + $0xb8] sm:$0xff] %v843
        %876 = vst [vmem:[%s298 + $0xc0] sm:$0xff] %v844
        %877 = vst [vmem:[%s298 + $0xc8] sm:$0xff] %v845
        %878 = vst [vmem:[%s298 + $0xd0] sm:$0xff] %v846
        %879 = vst [vmem:[%s298 + $0xd8] sm:$0xff] %v847
        %880 = vst [vmem:[%s298 + $0xe0] sm:$0xff] %v848
        %881 = vst [vmem:[%s298 + $0xe8] sm:$0xff] %v849
        %882 = vst [vmem:[%s298 + $0xf0] sm:$0xff] %v850
        %883 = vst [vmem:[%s298 + $0xf8] sm:$0xff] %v851
      $region44: #{_lambda_.4} parent=35 // pred_fallthru
        _
      %s884 = smul.u32 32, %s20
      %p885 = scmp.lt.s32.totalorder %s884, 63
      %s886 = scalar_select %p885, %s884, 63
      %p887 = scmp.lt.s32.totalorder %s21, 0
      %s888 = scalar_select %p887, %s21, 0
      %s889 = sadd.s32 %s888, %s886
      %s890 = smul.addr %s889, 8
      %s891 = scalar_lea.vmem %s4, %s890
      // Predicated region
      $region45: #{_lambda_.4} parent=35 // pred_check
        %p892 = pneg %p162
      $region46: #{_lambda_.4} parent=35 // pred_check_branch
        %894 = sbr.rel (%p892) target = $region48
      $region47: #{_lambda_.4} parent=35 // pred_region
        %s895 = smul.u32 32, %s20
      $region48: #{_lambda_.4} parent=35 // pred_fallthru
        _
    $region36: #{_lambda_.4} parent=5 // pred_fallthru
      _
    %p896 = scmp.le.s32.totalorder 2, %s10
    // Predicated region
    $region49: #{_lambda_.4} parent=5 // pred_check
      %p897 = pneg %p896
    $region50: #{_lambda_.4} parent=5 // pred_check_branch
      %899 = sbr.rel (%p897) target = $region52
    $region51: #{_lambda_.4} parent=5 // pred_region
      %s900 = ssub.s32 %s10, 2
      // Predicated region
      $region53: #{_lambda_.4} parent=51 // pred_check
        %p901 = pneg %p168
      $region54: #{_lambda_.4} parent=51 // pred_check_branch
        %903 = sbr.rel (%p901) target = $region56
      $region55: #{_lambda_.4} parent=51 // pred_region
        %s904 = smul.u32 32, %s23
        %p905 = scmp.lt.s32.totalorder %s904, 63
        %s906 = scalar_select %p905, %s904, 63
        %p907 = scmp.lt.s32.totalorder %s24, 0
        %s908 = scalar_select %p907, %s24, 0
        %s909 = sadd.s32 %s908, %s906
        %s910 = smul.addr %s909, 8
        %s911 = scalar_lea.vmem %s4, %s910
      $region56: #{_lambda_.4} parent=51 // pred_fallthru
        _
    $region52: #{_lambda_.4} parent=5 // pred_fallthru
      _
  $region6: #{_lambda_.4} parent=0 // loop_footer
    %s14 = sadd.s32 1, %s10
  $region7: #{_lambda_.4} parent=0 // loop_footer_branch
    %9 = sbr.rel target = $region3
  $region8: #{_lambda_.4} parent=0 // loop_exit
    _

// kernel: _lambda_.5
$region0: #{_lambda_.5}
  #allocation0 [shape = 'u32[]', space=smem, size = 0x4, offset = 0x4, fixed_abs, tag = 'smem constant byte address 0x4 - core index']
  #allocation1 [shape = 'u32[72,128]{1,0:T(1,128)}', space=vmem, size = 0x9000, scoped, tag = 'internal scratch']
  #allocation2 [shape = 'f32[128,128]{1,0:T(8,128)}', space=vmem, size = 0x10000, scoped, tag = 'scratch operand']
  %s0 = inlined_call_operand.vmem [shape: bf16[128,384], index: 0, kind: input, shape index: {}]
  %s1 = inlined_call_operand.vmem [shape: bf16[384,128], index: 1, kind: input, shape index: {}]
  %s2 = inlined_call_operand.vmem [shape: f32[1,128], index: 2, kind: input, shape index: {}]
  %s3 = inlined_call_operand.vmem [shape: f32[1,128], index: 3, kind: input, shape index: {}]
  %s4 = inlined_call_operand.vmem [shape: f32[128,128], index: 4, kind: output, shape index: {}]
  %s5 = sld [smem:[#allocation0]]
  $region34: #{_lambda_.5} parent=0
    _
  %s7 = ssub.s32 1, %s5
  %s8 = scalar_select 0, %s7, %s5
  // Predicated region
  $region2: #{_lambda_.5} parent=0 // pred_check
    _
  $region3: #{_lambda_.5} parent=0 // pred_check_branch
    %10 = sbr.rel (0) target = $region5
  $region4: #{_lambda_.5} parent=0 // pred_region
    _
  $region5: #{_lambda_.5} parent=0 // pred_fallthru
    _
  // Predicated region
  $region6: #{_lambda_.5} parent=0 // pred_check
    _
  $region7: #{_lambda_.5} parent=0 // pred_check_branch
    %12 = sbr.rel (0) target = $region9
  $region8: #{_lambda_.5} parent=0 // pred_region
    _
  $region9: #{_lambda_.5} parent=0 // pred_fallthru
    _
  // Predicated region
  $region10: #{_lambda_.5} parent=0 // pred_check
    _
  $region11: #{_lambda_.5} parent=0 // pred_check_branch
    %14 = sbr.rel (0) target = $region13
  $region12: #{_lambda_.5} parent=0 // pred_region
    _
  $region13: #{_lambda_.5} parent=0 // pred_fallthru
    _
  // Predicated region
  $region14: #{_lambda_.5} parent=0 // pred_check
    _
  $region15: #{_lambda_.5} parent=0 // pred_check_branch
    %16 = sbr.rel (0) target = $region17
  $region16: #{_lambda_.5} parent=0 // pred_region
    _
  $region17: #{_lambda_.5} parent=0 // pred_fallthru
    _
  %p17 = scmp.eq.s32.totalorder 0, 0
  // Predicated region
  $region18: #{_lambda_.5} parent=0 // pred_check
    %p18 = pneg %p17
  $region19: #{_lambda_.5} parent=0 // pred_check_branch
    %20 = sbr.rel (%p18) target = $region21
  $region20: #{_lambda_.5} parent=0 // pred_region
    %21 = vst [vmem:[#allocation2] sm:$0xff] 0.0
    %22 = vst [vmem:[#allocation2 + $0x8] sm:$0xff] 0.0
    %23 = vst [vmem:[#allocation2 + $0x10] sm:$0xff] 0.0
    %24 = vst [vmem:[#allocation2 + $0x18] sm:$0xff] 0.0
    %25 = vst [vmem:[#allocation2 + $0x20] sm:$0xff] 0.0
    %26 = vst [vmem:[#allocation2 + $0x28] sm:$0xff] 0.0
    %27 = vst [vmem:[#allocation2 + $0x30] sm:$0xff] 0.0
    %28 = vst [vmem:[#allocation2 + $0x38] sm:$0xff] 0.0
    %29 = vst [vmem:[#allocation2 + $0x40] sm:$0xff] 0.0
    %30 = vst [vmem:[#allocation2 + $0x48] sm:$0xff] 0.0
    %31 = vst [vmem:[#allocation2 + $0x50] sm:$0xff] 0.0
    %32 = vst [vmem:[#allocation2 + $0x58] sm:$0xff] 0.0
    %33 = vst [vmem:[#allocation2 + $0x60] sm:$0xff] 0.0
    %34 = vst [vmem:[#allocation2 + $0x68] sm:$0xff] 0.0
    %35 = vst [vmem:[#allocation2 + $0x70] sm:$0xff] 0.0
    %36 = vst [vmem:[#allocation2 + $0x78] sm:$0xff] 0.0
  $region21: #{_lambda_.5} parent=0 // pred_fallthru
    _
  %v37 = vld [vmem:[#allocation2] sm:$0xff]
  %v38 = vld [vmem:[#allocation2 + $0x8] sm:$0xff]
  %v39 = vld [vmem:[#allocation2 + $0x10] sm:$0xff]
  %v40 = vld [vmem:[#allocation2 + $0x18] sm:$0xff]
  %v41 = vld [vmem:[#allocation2 + $0x20] sm:$0xff]
  %v42 = vld [vmem:[#allocation2 + $0x28] sm:$0xff]
  %v43 = vld [vmem:[#allocation2 + $0x30] sm:$0xff]
  %v44 = vld [vmem:[#allocation2 + $0x38] sm:$0xff]
  %v45 = vld [vmem:[#allocation2 + $0x40] sm:$0xff]
  %v46 = vld [vmem:[#allocation2 + $0x48] sm:$0xff]
  %v47 = vld [vmem:[#allocation2 + $0x50] sm:$0xff]
  %v48 = vld [vmem:[#allocation2 + $0x58] sm:$0xff]
  %v49 = vld [vmem:[#allocation2 + $0x60] sm:$0xff]
  %v50 = vld [vmem:[#allocation2 + $0x68] sm:$0xff]
  %v51 = vld [vmem:[#allocation2 + $0x70] sm:$0xff]
  %v52 = vld [vmem:[#allocation2 + $0x78] sm:$0xff]
  %v53 = vld [vmem:[%s0] sm:$0xff]
  %v54 = vld [vmem:[%s0 + $0x8] sm:$0xf]
  %v55 = vld [vmem:[%s0 + $0xc] sm:$0xff]
  %v56 = vld [vmem:[%s0 + $0x14] sm:$0xf]
  %v57 = vld [vmem:[%s0 + $0x18] sm:$0xff]
  %v58 = vld [vmem:[%s0 + $0x20] sm:$0xf]
  %v59 = vld [vmem:[%s0 + $0x24] sm:$0xff]
  %v60 = vld [vmem:[%s0 + $0x2c] sm:$0xf]
  %v61 = vld [vmem:[%s0 + $0x30] sm:$0xff]
  %v62 = vld [vmem:[%s0 + $0x38] sm:$0xf]
  %v63 = vld [vmem:[%s0 + $0x3c] sm:$0xff]
  %v64 = vld [vmem:[%s0 + $0x44] sm:$0xf]
  %v65 = vld [vmem:[%s0 + $0x48] sm:$0xff]
  %v66 = vld [vmem:[%s0 + $0x50] sm:$0xf]
  %v67 = vld [vmem:[%s0 + $0x54] sm:$0xff]
  %v68 = vld [vmem:[%s0 + $0x5c] sm:$0xf]
  %v69 = vld [vmem:[%s0 + $0x60] sm:$0xff]
  %v70 = vld [vmem:[%s0 + $0x68] sm:$0xf]
  %v71 = vld [vmem:[%s0 + $0x6c] sm:$0xff]
  %v72 = vld [vmem:[%s0 + $0x74] sm:$0xf]
  %v73 = vld [vmem:[%s0 + $0x78] sm:$0xff]
  %v74 = vld [vmem:[%s0 + $0x80] sm:$0xf]
  %v75 = vld [vmem:[%s0 + $0x84] sm:$0xff]
  %v76 = vld [vmem:[%s0 + $0x8c] sm:$0xf]
  %v77 = vld [vmem:[%s0 + $0x90] sm:$0xff]
  %v78 = vld [vmem:[%s0 + $0x98] sm:$0xf]
  %v79 = vld [vmem:[%s0 + $0x9c] sm:$0xff]
  %v80 = vld [vmem:[%s0 + $0xa4] sm:$0xf]
  %v81 = vld [vmem:[%s0 + $0xa8] sm:$0xff]
  %v82 = vld [vmem:[%s0 + $0xb0] sm:$0xf]
  %v83 = vld [vmem:[%s0 + $0xb4] sm:$0xff]
  %v84 = vld [vmem:[%s0 + $0xbc] sm:$0xf]
  %v85 = vld [vmem:[%s1] sm:$0xf]
  %v86 = vld [vmem:[%s1 + $0x4] sm:$0xf]
  %v87 = vld [vmem:[%s1 + $0x8] sm:$0xf]
  %v88 = vld [vmem:[%s1 + $0xc] sm:$0xf]
  %v89 = vld [vmem:[%s1 + $0x10] sm:$0xf]
  %v90 = vld [vmem:[%s1 + $0x14] sm:$0xf]
  %v91 = vld [vmem:[%s1 + $0x18] sm:$0xf]
  %v92 = vld [vmem:[%s1 + $0x1c] sm:$0xf]
  %v93 = vld [vmem:[%s1 + $0x20] sm:$0xf]
  %v94 = vld [vmem:[%s1 + $0x24] sm:$0xf]
  %v95 = vld [vmem:[%s1 + $0x28] sm:$0xf]
  %v96 = vld [vmem:[%s1 + $0x2c] sm:$0xf]
  %v97 = vld [vmem:[%s1 + $0x30] sm:$0xf]
  %v98 = vld [vmem:[%s1 + $0x34] sm:$0xf]
  %v99 = vld [vmem:[%s1 + $0x38] sm:$0xf]
  %v100 = vld [vmem:[%s1 + $0x3c] sm:$0xf]
  %v101 = vld [vmem:[%s1 + $0x40] sm:$0xf]
  %v102 = vld [vmem:[%s1 + $0x44] sm:$0xf]
  %v103 = vld [vmem:[%s1 + $0x48] sm:$0xf]
  %v104 = vld [vmem:[%s1 + $0x4c] sm:$0xf]
  %v105 = vld [vmem:[%s1 + $0x50] sm:$0xf]
  %v106 = vld [vmem:[%s1 + $0x54] sm:$0xf]
  %v107 = vld [vmem:[%s1 + $0x58] sm:$0xf]
  %v108 = vld [vmem:[%s1 + $0x5c] sm:$0xf]
  %v109 = vld [vmem:[%s1 + $0x60] sm:$0xf]
  %v110 = vld [vmem:[%s1 + $0x64] sm:$0xf]
  %v111 = vld [vmem:[%s1 + $0x68] sm:$0xf]
  %v112 = vld [vmem:[%s1 + $0x6c] sm:$0xf]
  %v113 = vld [vmem:[%s1 + $0x70] sm:$0xf]
  %v114 = vld [vmem:[%s1 + $0x74] sm:$0xf]
  %v115 = vld [vmem:[%s1 + $0x78] sm:$0xf]
  %v116 = vld [vmem:[%s1 + $0x7c] sm:$0xf]
  %v117 = vld [vmem:[%s1 + $0x80] sm:$0xf]
  %v118 = vld [vmem:[%s1 + $0x84] sm:$0xf]
  %v119 = vld [vmem:[%s1 + $0x88] sm:$0xf]
  %v120 = vld [vmem:[%s1 + $0x8c] sm:$0xf]
  %v121 = vld [vmem:[%s1 + $0x90] sm:$0xf]
  %v122 = vld [vmem:[%s1 + $0x94] sm:$0xf]
  %v123 = vld [vmem:[%s1 + $0x98] sm:$0xf]
  %v124 = vld [vmem:[%s1 + $0x9c] sm:$0xf]
  %v125 = vld [vmem:[%s1 + $0xa0] sm:$0xf]
  %v126 = vld [vmem:[%s1 + $0xa4] sm:$0xf]
  %v127 = vld [vmem:[%s1 + $0xa8] sm:$0xf]
  %v128 = vld [vmem:[%s1 + $0xac] sm:$0xf]
  %v129 = vld [vmem:[%s1 + $0xb0] sm:$0xf]
  %v130 = vld [vmem:[%s1 + $0xb4] sm:$0xf]
  %v131 = vld [vmem:[%s1 + $0xb8] sm:$0xf]
  %v132 = vld [vmem:[%s1 + $0xbc] sm:$0xf]
  %v165 = vunpack.c.l.b16 %v53
  %v166 = vunpack.c.h.b16 %v53
  %v167 = vunpack.c.l.b16 %v54
  %v168 = vunpack.c.l.b16 %v55
  %v169 = vunpack.c.h.b16 %v55
  %v170 = vunpack.c.l.b16 %v56
  %v171 = vunpack.c.l.b16 %v57
  %v172 = vunpack.c.h.b16 %v57
  %v173 = vunpack.c.l.b16 %v58
  %v174 = vunpack.c.l.b16 %v59
  %v175 = vunpack.c.h.b16 %v59
  %v176 = vunpack.c.l.b16 %v60
  %v177 = vunpack.c.l.b16 %v61
  %v178 = vunpack.c.h.b16 %v61
  %v179 = vunpack.c.l.b16 %v62
  %v180 = vunpack.c.l.b16 %v63
  %v181 = vunpack.c.h.b16 %v63
  %v182 = vunpack.c.l.b16 %v64
  %v183 = vunpack.c.l.b16 %v65
  %v184 = vunpack.c.h.b16 %v65
  %v185 = vunpack.c.l.b16 %v66
  %v186 = vunpack.c.l.b16 %v67
  %v187 = vunpack.c.h.b16 %v67
  %v188 = vunpack.c.l.b16 %v68
  %v189 = vunpack.c.l.b16 %v69
  %v190 = vunpack.c.h.b16 %v69
  %v191 = vunpack.c.l.b16 %v70
  %v192 = vunpack.c.l.b16 %v71
  %v193 = vunpack.c.h.b16 %v71
  %v194 = vunpack.c.l.b16 %v72
  %v195 = vunpack.c.l.b16 %v73
  %v196 = vunpack.c.h.b16 %v73
  %v197 = vunpack.c.l.b16 %v74
  %v198 = vunpack.c.l.b16 %v75
  %v199 = vunpack.c.h.b16 %v75
  %v200 = vunpack.c.l.b16 %v76
  %v201 = vunpack.c.l.b16 %v77
  %v202 = vunpack.c.h.b16 %v77
  %v203 = vunpack.c.l.b16 %v78
  %v204 = vunpack.c.l.b16 %v79
  %v205 = vunpack.c.h.b16 %v79
  %v206 = vunpack.c.l.b16 %v80
  %v207 = vunpack.c.l.b16 %v81
  %v208 = vunpack.c.h.b16 %v81
  %v209 = vunpack.c.l.b16 %v82
  %v210 = vunpack.c.l.b16 %v83
  %v211 = vunpack.c.h.b16 %v83
  %v212 = vunpack.c.l.b16 %v84
  %v213 = vpack.c.b16 %v168, %v165
  %v214 = vpack.c.b16 %v169, %v166
  %v215 = vpack.c.b16 %v170, %v167
  %v216 = vpack.c.b16 %v174, %v171
  %v217 = vpack.c.b16 %v175, %v172
  %v218 = vpack.c.b16 %v176, %v173
  %v219 = vpack.c.b16 %v180, %v177
  %v220 = vpack.c.b16 %v181, %v178
  %v221 = vpack.c.b16 %v182, %v179
  %v222 = vpack.c.b16 %v186, %v183
  %v223 = vpack.c.b16 %v187, %v184
  %v224 = vpack.c.b16 %v188, %v185
  %v225 = vpack.c.b16 %v192, %v189
  %v226 = vpack.c.b16 %v193, %v190
  %v227 = vpack.c.b16 %v194, %v191
  %v228 = vpack.c.b16 %v198, %v195
  %v229 = vpack.c.b16 %v199, %v196
  %v230 = vpack.c.b16 %v200, %v197
  %v231 = vpack.c.b16 %v204, %v201
  %v232 = vpack.c.b16 %v205, %v202
  %v233 = vpack.c.b16 %v206, %v203
  %v234 = vpack.c.b16 %v210, %v207
  %v235 = vpack.c.b16 %v211, %v208
  %v236 = vpack.c.b16 %v212, %v209
  %v309 = vunpack.c.l.b16 %v85
  %v310 = vunpack.c.l.b16 %v86
  %v311 = vunpack.c.l.b16 %v87
  %v312 = vunpack.c.l.b16 %v88
  %v313 = vunpack.c.l.b16 %v89
  %v314 = vunpack.c.l.b16 %v90
  %v315 = vunpack.c.l.b16 %v91
  %v316 = vunpack.c.l.b16 %v92
  %v317 = vunpack.c.l.b16 %v93
  %v318 = vunpack.c.l.b16 %v94
  %v319 = vunpack.c.l.b16 %v95
  %v320 = vunpack.c.l.b16 %v96
  %v321 = vunpack.c.l.b16 %v97
  %v322 = vunpack.c.l.b16 %v98
  %v323 = vunpack.c.l.b16 %v99
  %v324 = vunpack.c.l.b16 %v100
  %v325 = vunpack.c.l.b16 %v101
  %v326 = vunpack.c.l.b16 %v102
  %v327 = vunpack.c.l.b16 %v103
  %v328 = vunpack.c.l.b16 %v104
  %v329 = vunpack.c.l.b16 %v105
  %v330 = vunpack.c.l.b16 %v106
  %v331 = vunpack.c.l.b16 %v107
  %v332 = vunpack.c.l.b16 %v108
  %v333 = vunpack.c.l.b16 %v109
  %v334 = vunpack.c.l.b16 %v110
  %v335 = vunpack.c.l.b16 %v111
  %v336 = vunpack.c.l.b16 %v112
  %v337 = vunpack.c.l.b16 %v113
  %v338 = vunpack.c.l.b16 %v114
  %v339 = vunpack.c.l.b16 %v115
  %v340 = vunpack.c.l.b16 %v116
  %v341 = vunpack.c.l.b16 %v117
  %v342 = vunpack.c.l.b16 %v118
  %v343 = vunpack.c.l.b16 %v119
  %v344 = vunpack.c.l.b16 %v120
  %v345 = vunpack.c.l.b16 %v121
  %v346 = vunpack.c.l.b16 %v122
  %v347 = vunpack.c.l.b16 %v123
  %v348 = vunpack.c.l.b16 %v124
  %v349 = vunpack.c.l.b16 %v125
  %v350 = vunpack.c.l.b16 %v126
  %v351 = vunpack.c.l.b16 %v127
  %v352 = vunpack.c.l.b16 %v128
  %v353 = vunpack.c.l.b16 %v129
  %v354 = vunpack.c.l.b16 %v130
  %v355 = vunpack.c.l.b16 %v131
  %v356 = vunpack.c.l.b16 %v132
  %v357 = vpack.c.b16 %v310, %v309
  %v358 = vpack.c.b16 %v312, %v311
  %v359 = vpack.c.b16 %v314, %v313
  %v360 = vpack.c.b16 %v316, %v315
  %v361 = vpack.c.b16 %v318, %v317
  %v362 = vpack.c.b16 %v320, %v319
  %v363 = vpack.c.b16 %v322, %v321
  %v364 = vpack.c.b16 %v324, %v323
  %v365 = vpack.c.b16 %v326, %v325
  %v366 = vpack.c.b16 %v328, %v327
  %v367 = vpack.c.b16 %v330, %v329
  %v368 = vpack.c.b16 %v332, %v331
  %v369 = vpack.c.b16 %v334, %v333
  %v370 = vpack.c.b16 %v336, %v335
  %v371 = vpack.c.b16 %v338, %v337
  %v372 = vpack.c.b16 %v340, %v339
  %v373 = vpack.c.b16 %v342, %v341
  %v374 = vpack.c.b16 %v344, %v343
  %v375 = vpack.c.b16 %v346, %v345
  %v376 = vpack.c.b16 %v348, %v347
  %v377 = vpack.c.b16 %v350, %v349
  %v378 = vpack.c.b16 %v352, %v351
  %v379 = vpack.c.b16 %v354, %v353
  %v380 = vpack.c.b16 %v356, %v355
  %405 = vmatpush.bf16.msra.mxu0 %v364
  %406 = vmatpush.bf16.msra.mxu0 %v363
  %407 = vmatpush.bf16.msra.mxu0 %v362
  %408 = vmatpush.bf16.msra.mxu0 %v361
  %409 = vmatpush.bf16.msra.mxu0 %v360
  %410 = vmatpush.bf16.msra.mxu0 %v359
  %411 = vmatpush.bf16.msra.mxu0 %v358
  %412 = vmatpush.bf16.msra.mxu0 %v357
  %413 = vmatmul.bf16.gmra.mxu0 %v213
  %v414 = vpop.f32.mrf.mxu0
  %v415 = vadd.f32 0.0, %v414
  %v416 = vpop.f32.mrf.mxu0
  %v417 = vadd.f32 0.0, %v416
  %418 = vmatmul.bf16.gmra.mxu0 %v216
  %v419 = vpop.f32.mrf.mxu0
  %v420 = vadd.f32 0.0, %v419
  %v421 = vpop.f32.mrf.mxu0
  %v422 = vadd.f32 0.0, %v421
  %423 = vmatmul.bf16.gmra.mxu0 %v219
  %v424 = vpop.f32.mrf.mxu0
  %v425 = vadd.f32 0.0, %v424
  %v426 = vpop.f32.mrf.mxu0
  %v427 = vadd.f32 0.0, %v426
  %428 = vmatmul.bf16.gmra.mxu0 %v222
  %v429 = vpop.f32.mrf.mxu0
  %v430 = vadd.f32 0.0, %v429
  %v431 = vpop.f32.mrf.mxu0
  %v432 = vadd.f32 0.0, %v431
  %433 = vmatmul.bf16.gmra.mxu0 %v225
  %v434 = vpop.f32.mrf.mxu0
  %v435 = vadd.f32 0.0, %v434
  %v436 = vpop.f32.mrf.mxu0
  %v437 = vadd.f32 0.0, %v436
  %438 = vmatmul.bf16.gmra.mxu0 %v228
  %v439 = vpop.f32.mrf.mxu0
  %v440 = vadd.f32 0.0, %v439
  %v441 = vpop.f32.mrf.mxu0
  %v442 = vadd.f32 0.0, %v441
  %443 = vmatmul.bf16.gmra.mxu0 %v231
  %v444 = vpop.f32.mrf.mxu0
  %v445 = vadd.f32 0.0, %v444
  %v446 = vpop.f32.mrf.mxu0
  %v447 = vadd.f32 0.0, %v446
  %448 = vmatmul.bf16.gmra.mxu0 %v234
  %v449 = vpop.f32.mrf.mxu0
  %v450 = vadd.f32 0.0, %v449
  %v451 = vpop.f32.mrf.mxu0
  %v452 = vadd.f32 0.0, %v451
  %453 = vdwg.mxu0
  %454 = vmatpush.bf16.msra.mxu0 %v372
  %455 = vmatpush.bf16.msra.mxu0 %v371
  %456 = vmatpush.bf16.msra.mxu0 %v370
  %457 = vmatpush.bf16.msra.mxu0 %v369
  %458 = vmatpush.bf16.msra.mxu0 %v368
  %459 = vmatpush.bf16.msra.mxu0 %v367
  %460 = vmatpush.bf16.msra.mxu0 %v366
  %461 = vmatpush.bf16.msra.mxu0 %v365
  %462 = vmatmul.bf16.gmra.mxu0 %v214
  %v463 = vpop.f32.mrf.mxu0
  %v464 = vadd.f32 %v415, %v463
  %v465 = vpop.f32.mrf.mxu0
  %v466 = vadd.f32 %v417, %v465
  %467 = vmatmul.bf16.gmra.mxu0 %v217
  %v468 = vpop.f32.mrf.mxu0
  %v469 = vadd.f32 %v420, %v468
  %v470 = vpop.f32.mrf.mxu0
  %v471 = vadd.f32 %v422, %v470
  %472 = vmatmul.bf16.gmra.mxu0 %v220
  %v473 = vpop.f32.mrf.mxu0
  %v474 = vadd.f32 %v425, %v473
  %v475 = vpop.f32.mrf.mxu0
  %v476 = vadd.f32 %v427, %v475
  %477 = vmatmul.bf16.gmra.mxu0 %v223
  %v478 = vpop.f32.mrf.mxu0
  %v479 = vadd.f32 %v430, %v478
  %v480 = vpop.f32.mrf.mxu0
  %v481 = vadd.f32 %v432, %v480
  %482 = vmatmul.bf16.gmra.mxu0 %v226
  %v483 = vpop.f32.mrf.mxu0
  %v484 = vadd.f32 %v435, %v483
  %v485 = vpop.f32.mrf.mxu0
  %v486 = vadd.f32 %v437, %v485
  %487 = vmatmul.bf16.gmra.mxu0 %v229
  %v488 = vpop.f32.mrf.mxu0
  %v489 = vadd.f32 %v440, %v488
  %v490 = vpop.f32.mrf.mxu0
  %v491 = vadd.f32 %v442, %v490
  %492 = vmatmul.bf16.gmra.mxu0 %v232
  %v493 = vpop.f32.mrf.mxu0
  %v494 = vadd.f32 %v445, %v493
  %v495 = vpop.f32.mrf.mxu0
  %v496 = vadd.f32 %v447, %v495
  %497 = vmatmul.bf16.gmra.mxu0 %v235
  %v498 = vpop.f32.mrf.mxu0
  %v499 = vadd.f32 %v450, %v498
  %v500 = vpop.f32.mrf.mxu0
  %v501 = vadd.f32 %v452, %v500
  %502 = vdwg.mxu0
  %503 = vmatpush.bf16.msra.mxu0 %v380
  %504 = vmatpush.bf16.msra.mxu0 %v379
  %505 = vmatpush.bf16.msra.mxu0 %v378
  %506 = vmatpush.bf16.msra.mxu0 %v377
  %507 = vmatpush.bf16.msra.mxu0 %v376
  %508 = vmatpush.bf16.msra.mxu0 %v375
  %509 = vmatpush.bf16.msra.mxu0 %v374
  %510 = vmatpush.bf16.msra.mxu0 %v373
  %511 = vmatmul.bf16.gmra.mxu0 %v215
  %v512 = vpop.f32.mrf.mxu0
  %v513 = vadd.f32 %v464, %v512
  %v514 = vpop.f32.mrf.mxu0
  %v515 = vadd.f32 %v466, %v514
  %516 = vmatmul.bf16.gmra.mxu0 %v218
  %v517 = vpop.f32.mrf.mxu0
  %v518 = vadd.f32 %v469, %v517
  %v519 = vpop.f32.mrf.mxu0
  %v520 = vadd.f32 %v471, %v519
  %521 = vmatmul.bf16.gmra.mxu0 %v221
  %v522 = vpop.f32.mrf.mxu0
  %v523 = vadd.f32 %v474, %v522
  %v524 = vpop.f32.mrf.mxu0
  %v525 = vadd.f32 %v476, %v524
  %526 = vmatmul.bf16.gmra.mxu0 %v224
  %v527 = vpop.f32.mrf.mxu0
  %v528 = vadd.f32 %v479, %v527
  %v529 = vpop.f32.mrf.mxu0
  %v530 = vadd.f32 %v481, %v529
  %531 = vmatmul.bf16.gmra.mxu0 %v227
  %v532 = vpop.f32.mrf.mxu0
  %v533 = vadd.f32 %v484, %v532
  %v534 = vpop.f32.mrf.mxu0
  %v535 = vadd.f32 %v486, %v534
  %536 = vmatmul.bf16.gmra.mxu0 %v230
  %v537 = vpop.f32.mrf.mxu0
  %v538 = vadd.f32 %v489, %v537
  %v539 = vpop.f32.mrf.mxu0
  %v540 = vadd.f32 %v491, %v539
  %541 = vmatmul.bf16.gmra.mxu0 %v233
  %v542 = vpop.f32.mrf.mxu0
  %v543 = vadd.f32 %v494, %v542
  %v544 = vpop.f32.mrf.mxu0
  %v545 = vadd.f32 %v496, %v544
  %546 = vmatmul.bf16.gmra.mxu0 %v236
  %v547 = vpop.f32.mrf.mxu0
  %v548 = vadd.f32 %v499, %v547
  %v549 = vpop.f32.mrf.mxu0
  %v550 = vadd.f32 %v501, %v549
  %551 = vdwg.mxu0
  %v552 = vadd.f32 %v37, %v513
  %v553 = vadd.f32 %v38, %v515
  %v554 = vadd.f32 %v39, %v518
  %v555 = vadd.f32 %v40, %v520
  %v556 = vadd.f32 %v41, %v523
  %v557 = vadd.f32 %v42, %v525
  %v558 = vadd.f32 %v43, %v528
  %v559 = vadd.f32 %v44, %v530
  %v560 = vadd.f32 %v45, %v533
  %v561 = vadd.f32 %v46, %v535
  %v562 = vadd.f32 %v47, %v538
  %v563 = vadd.f32 %v48, %v540
  %v564 = vadd.f32 %v49, %v543
  %v565 = vadd.f32 %v50, %v545
  %v566 = vadd.f32 %v51, %v548
  %v567 = vadd.f32 %v52, %v550
  %568 = vst [vmem:[#allocation2] sm:$0xff] %v552
  %569 = vst [vmem:[#allocation2 + $0x8] sm:$0xff] %v553
  %570 = vst [vmem:[#allocation2 + $0x10] sm:$0xff] %v554
  %571 = vst [vmem:[#allocation2 + $0x18] sm:$0xff] %v555
  %572 = vst [vmem:[#allocation2 + $0x20] sm:$0xff] %v556
  %573 = vst [vmem:[#allocation2 + $0x28] sm:$0xff] %v557
  %574 = vst [vmem:[#allocation2 + $0x30] sm:$0xff] %v558
  %575 = vst [vmem:[#allocation2 + $0x38] sm:$0xff] %v559
  %576 = vst [vmem:[#allocation2 + $0x40] sm:$0xff] %v560
  %577 = vst [vmem:[#allocation2 + $0x48] sm:$0xff] %v561
  %578 = vst [vmem:[#allocation2 + $0x50] sm:$0xff] %v562
  %579 = vst [vmem:[#allocation2 + $0x58] sm:$0xff] %v563
  %580 = vst [vmem:[#allocation2 + $0x60] sm:$0xff] %v564
  %581 = vst [vmem:[#allocation2 + $0x68] sm:$0xff] %v565
  %582 = vst [vmem:[#allocation2 + $0x70] sm:$0xff] %v566
  %583 = vst [vmem:[#allocation2 + $0x78] sm:$0xff] %v567
  // Predicated region
  $region22: #{_lambda_.5} parent=0 // pred_check
    %p584 = pneg %p17
  $region23: #{_lambda_.5} parent=0 // pred_check_branch
    %586 = sbr.rel (%p584) target = $region25
  $region24: #{_lambda_.5} parent=0 // pred_region
    %v587 = vld [vmem:[#allocation2] sm:$0xff]
    %v588 = vld [vmem:[#allocation2 + $0x8] sm:$0xff]
    %v589 = vld [vmem:[#allocation2 + $0x10] sm:$0xff]
    %v590 = vld [vmem:[#allocation2 + $0x18] sm:$0xff]
    %v591 = vld [vmem:[#allocation2 + $0x20] sm:$0xff]
    %v592 = vld [vmem:[#allocation2 + $0x28] sm:$0xff]
    %v593 = vld [vmem:[#allocation2 + $0x30] sm:$0xff]
    %v594 = vld [vmem:[#allocation2 + $0x38] sm:$0xff]
    %v595 = vld [vmem:[#allocation2 + $0x40] sm:$0xff]
    %v596 = vld [vmem:[#allocation2 + $0x48] sm:$0xff]
    %v597 = vld [vmem:[#allocation2 + $0x50] sm:$0xff]
    %v598 = vld [vmem:[#allocation2 + $0x58] sm:$0xff]
    %v599 = vld [vmem:[#allocation2 + $0x60] sm:$0xff]
    %v600 = vld [vmem:[#allocation2 + $0x68] sm:$0xff]
    %v601 = vld [vmem:[#allocation2 + $0x70] sm:$0xff]
    %v602 = vld [vmem:[#allocation2 + $0x78] sm:$0xff]
    %v603 = vld [vmem:[%s2] sm:$0x1]
    %v605 = vperm.slane %v603, 0
    %v607 = vmul.f32 %v587, %v605
    %v608 = vmul.f32 %v588, %v605
    %v609 = vmul.f32 %v589, %v605
    %v610 = vmul.f32 %v590, %v605
    %v611 = vmul.f32 %v591, %v605
    %v612 = vmul.f32 %v592, %v605
    %v613 = vmul.f32 %v593, %v605
    %v614 = vmul.f32 %v594, %v605
    %v615 = vmul.f32 %v595, %v605
    %v616 = vmul.f32 %v596, %v605
    %v617 = vmul.f32 %v597, %v605
    %v618 = vmul.f32 %v598, %v605
    %v619 = vmul.f32 %v599, %v605
    %v620 = vmul.f32 %v600, %v605
    %v621 = vmul.f32 %v601, %v605
    %v622 = vmul.f32 %v602, %v605
    %v623 = vld [vmem:[%s3] sm:$0x1]
    %v625 = vperm.slane %v623, 0
    %v627 = vadd.f32 %v607, %v625
    %v628 = vadd.f32 %v608, %v625
    %v629 = vadd.f32 %v609, %v625
    %v630 = vadd.f32 %v610, %v625
    %v631 = vadd.f32 %v611, %v625
    %v632 = vadd.f32 %v612, %v625
    %v633 = vadd.f32 %v613, %v625
    %v634 = vadd.f32 %v614, %v625
    %v635 = vadd.f32 %v615, %v625
    %v636 = vadd.f32 %v616, %v625
    %v637 = vadd.f32 %v617, %v625
    %v638 = vadd.f32 %v618, %v625
    %v639 = vadd.f32 %v619, %v625
    %v640 = vadd.f32 %v620, %v625
    %v641 = vadd.f32 %v621, %v625
    %v642 = vadd.f32 %v622, %v625
    %v643 = vmax.f32 %v627, 0.0
    %v644 = vmax.f32 %v628, 0.0
    %v645 = vmax.f32 %v629, 0.0
    %v646 = vmax.f32 %v630, 0.0
    %v647 = vmax.f32 %v631, 0.0
    %v648 = vmax.f32 %v632, 0.0
    %v649 = vmax.f32 %v633, 0.0
    %v650 = vmax.f32 %v634, 0.0
    %v651 = vmax.f32 %v635, 0.0
    %v652 = vmax.f32 %v636, 0.0
    %v653 = vmax.f32 %v637, 0.0
    %v654 = vmax.f32 %v638, 0.0
    %v655 = vmax.f32 %v639, 0.0
    %v656 = vmax.f32 %v640, 0.0
    %v657 = vmax.f32 %v641, 0.0
    %v658 = vmax.f32 %v642, 0.0
    %659 = vst [vmem:[%s4] sm:$0xff] %v643
    %660 = vst [vmem:[%s4 + $0x8] sm:$0xff] %v644
    %661 = vst [vmem:[%s4 + $0x10] sm:$0xff] %v645
    %662 = vst [vmem:[%s4 + $0x18] sm:$0xff] %v646
    %663 = vst [vmem:[%s4 + $0x20] sm:$0xff] %v647
    %664 = vst [vmem:[%s4 + $0x28] sm:$0xff] %v648
    %665 = vst [vmem:[%s4 + $0x30] sm:$0xff] %v649
    %666 = vst [vmem:[%s4 + $0x38] sm:$0xff] %v650
    %667 = vst [vmem:[%s4 + $0x40] sm:$0xff] %v651
    %668 = vst [vmem:[%s4 + $0x48] sm:$0xff] %v652
    %669 = vst [vmem:[%s4 + $0x50] sm:$0xff] %v653
    %670 = vst [vmem:[%s4 + $0x58] sm:$0xff] %v654
    %671 = vst [vmem:[%s4 + $0x60] sm:$0xff] %v655
    %672 = vst [vmem:[%s4 + $0x68] sm:$0xff] %v656
    %673 = vst [vmem:[%s4 + $0x70] sm:$0xff] %v657
    %674 = vst [vmem:[%s4 + $0x78] sm:$0xff] %v658
  $region25: #{_lambda_.5} parent=0 // pred_fallthru
    _
  // Predicated region
  $region26: #{_lambda_.5} parent=0 // pred_check
    _
  $region27: #{_lambda_.5} parent=0 // pred_check_branch
    %676 = sbr.rel (0) target = $region29
  $region28: #{_lambda_.5} parent=0 // pred_region
    _
  $region29: #{_lambda_.5} parent=0 // pred_fallthru
    _
  // Predicated region
  $region30: #{_lambda_.5} parent=0 // pred_check
    _
  $region31: #{_lambda_.5} parent=0 // pred_check_branch
    %678 = sbr.rel (0) target = $region33
  $region32: #{_lambda_.5} parent=0 // pred_region
    _
  $region33: #{_lambda_.5} parent=0 // pred_fallthru
    _

// kernel: _lambda_.7
$region0: #{_lambda_.7}
  #allocation0 [shape = 'u32[]', space=smem, size = 0x4, offset = 0x4, fixed_abs, tag = 'smem constant byte address 0x4 - core index']
  #allocation1 [shape = 'u32[72,128]{1,0:T(1,128)}', space=vmem, size = 0x9000, scoped, tag = 'internal scratch']
  #allocation2 [shape = 'f32[128,128]{1,0:T(8,128)}', space=vmem, size = 0x10000, scoped, tag = 'scratch operand']
  %s0 = inlined_call_operand.vmem [shape: bf16[128,128], index: 0, kind: input, shape index: {}]
  %s1 = inlined_call_operand.vmem [shape: bf16[128,128], index: 1, kind: input, shape index: {}]
  %s2 = inlined_call_operand.vmem [shape: f32[1,128], index: 2, kind: input, shape index: {}]
  %s3 = inlined_call_operand.vmem [shape: f32[1,128], index: 3, kind: input, shape index: {}]
  %s4 = inlined_call_operand.vmem [shape: f32[128,128], index: 4, kind: input, shape index: {}]
  %s5 = inlined_call_operand.hbm [shape: f32[128,128], index: 5, kind: output, shape index: {}]
  %s6 = sld [smem:[#allocation0]]
  $region38: #{_lambda_.7} parent=0
    _
  %s8 = ssub.s32 1, %s6
  %s9 = scalar_select 0, %s8, %s6
  $region1: #{_lambda_.7} parent=0
    #allocation3 [shape = 'u8[65536]{0}', space=vmem, size = 0x10000, scoped, tag = 'output window, operand 0, single buffered']
    #allocation4 [shape = 's32[1]{0}', space=sflag, size = 0x4, scoped, tag = 'scoped memory for _lambda_.7']
    %10 = vsyncpa [#allocation4], 0
    // Predicated region
    $region2: #{_lambda_.7} parent=1 // pred_check
      _
    $region3: #{_lambda_.7} parent=1 // pred_check_branch
      %12 = sbr.rel (0) target = $region5
    $region4: #{_lambda_.7} parent=1 // pred_region
      _
    $region5: #{_lambda_.7} parent=1 // pred_fallthru
      _
    // Predicated region
    $region6: #{_lambda_.7} parent=1 // pred_check
      _
    $region7: #{_lambda_.7} parent=1 // pred_check_branch
      %14 = sbr.rel (0) target = $region9
    $region8: #{_lambda_.7} parent=1 // pred_region
      _
    $region9: #{_lambda_.7} parent=1 // pred_fallthru
      _
    // Predicated region
    $region10: #{_lambda_.7} parent=1 // pred_check
      _
    $region11: #{_lambda_.7} parent=1 // pred_check_branch
      %16 = sbr.rel (0) target = $region13
    $region12: #{_lambda_.7} parent=1 // pred_region
      _
    $region13: #{_lambda_.7} parent=1 // pred_fallthru
      _
    // Predicated region
    $region14: #{_lambda_.7} parent=1 // pred_check
      _
    $region15: #{_lambda_.7} parent=1 // pred_check_branch
      %18 = sbr.rel (0) target = $region17
    $region16: #{_lambda_.7} parent=1 // pred_region
      _
    $region17: #{_lambda_.7} parent=1 // pred_fallthru
      _
    // Predicated region
    $region18: #{_lambda_.7} parent=1 // pred_check
      _
    $region19: #{_lambda_.7} parent=1 // pred_check_branch
      %20 = sbr.rel (0) target = $region21
    $region20: #{_lambda_.7} parent=1 // pred_region
      _
    $region21: #{_lambda_.7} parent=1 // pred_fallthru
      _
    %p21 = scmp.eq.s32.totalorder 0, 0
    // Predicated region
    $region22: #{_lambda_.7} parent=1 // pred_check
      %p22 = pneg %p21
    $region23: #{_lambda_.7} parent=1 // pred_check_branch
      %24 = sbr.rel (%p22) target = $region25
    $region24: #{_lambda_.7} parent=1 // pred_region
      %25 = vst [vmem:[#allocation2] sm:$0xff] 0.0
      %26 = vst [vmem:[#allocation2 + $0x8] sm:$0xff] 0.0
      %27 = vst [vmem:[#allocation2 + $0x10] sm:$0xff] 0.0
      %28 = vst [vmem:[#allocation2 + $0x18] sm:$0xff] 0.0
      %29 = vst [vmem:[#allocation2 + $0x20] sm:$0xff] 0.0
      %30 = vst [vmem:[#allocation2 + $0x28] sm:$0xff] 0.0
      %31 = vst [vmem:[#allocation2 + $0x30] sm:$0xff] 0.0
      %32 = vst [vmem:[#allocation2 + $0x38] sm:$0xff] 0.0
      %33 = vst [vmem:[#allocation2 + $0x40] sm:$0xff] 0.0
      %34 = vst [vmem:[#allocation2 + $0x48] sm:$0xff] 0.0
      %35 = vst [vmem:[#allocation2 + $0x50] sm:$0xff] 0.0
      %36 = vst [vmem:[#allocation2 + $0x58] sm:$0xff] 0.0
      %37 = vst [vmem:[#allocation2 + $0x60] sm:$0xff] 0.0
      %38 = vst [vmem:[#allocation2 + $0x68] sm:$0xff] 0.0
      %39 = vst [vmem:[#allocation2 + $0x70] sm:$0xff] 0.0
      %40 = vst [vmem:[#allocation2 + $0x78] sm:$0xff] 0.0
    $region25: #{_lambda_.7} parent=1 // pred_fallthru
      _
    %v41 = vld [vmem:[#allocation2] sm:$0xff]
    %v42 = vld [vmem:[#allocation2 + $0x8] sm:$0xff]
    %v43 = vld [vmem:[#allocation2 + $0x10] sm:$0xff]
    %v44 = vld [vmem:[#allocation2 + $0x18] sm:$0xff]
    %v45 = vld [vmem:[#allocation2 + $0x20] sm:$0xff]
    %v46 = vld [vmem:[#allocation2 + $0x28] sm:$0xff]
    %v47 = vld [vmem:[#allocation2 + $0x30] sm:$0xff]
    %v48 = vld [vmem:[#allocation2 + $0x38] sm:$0xff]
    %v49 = vld [vmem:[#allocation2 + $0x40] sm:$0xff]
    %v50 = vld [vmem:[#allocation2 + $0x48] sm:$0xff]
    %v51 = vld [vmem:[#allocation2 + $0x50] sm:$0xff]
    %v52 = vld [vmem:[#allocation2 + $0x58] sm:$0xff]
    %v53 = vld [vmem:[#allocation2 + $0x60] sm:$0xff]
    %v54 = vld [vmem:[#allocation2 + $0x68] sm:$0xff]
    %v55 = vld [vmem:[#allocation2 + $0x70] sm:$0xff]
    %v56 = vld [vmem:[#allocation2 + $0x78] sm:$0xff]
    %v57 = vld [vmem:[%s0] sm:$0xf]
    %v58 = vld [vmem:[%s0 + $0x4] sm:$0xf]
    %v59 = vld [vmem:[%s0 + $0x8] sm:$0xf]
    %v60 = vld [vmem:[%s0 + $0xc] sm:$0xf]
    %v61 = vld [vmem:[%s0 + $0x10] sm:$0xf]
    %v62 = vld [vmem:[%s0 + $0x14] sm:$0xf]
    %v63 = vld [vmem:[%s0 + $0x18] sm:$0xf]
    %v64 = vld [vmem:[%s0 + $0x1c] sm:$0xf]
    %v65 = vld [vmem:[%s0 + $0x20] sm:$0xf]
    %v66 = vld [vmem:[%s0 + $0x24] sm:$0xf]
    %v67 = vld [vmem:[%s0 + $0x28] sm:$0xf]
    %v68 = vld [vmem:[%s0 + $0x2c] sm:$0xf]
    %v69 = vld [vmem:[%s0 + $0x30] sm:$0xf]
    %v70 = vld [vmem:[%s0 + $0x34] sm:$0xf]
    %v71 = vld [vmem:[%s0 + $0x38] sm:$0xf]
    %v72 = vld [vmem:[%s0 + $0x3c] sm:$0xf]
    %v73 = vld [vmem:[%s1] sm:$0xf]
    %v74 = vld [vmem:[%s1 + $0x4] sm:$0xf]
    %v75 = vld [vmem:[%s1 + $0x8] sm:$0xf]
    %v76 = vld [vmem:[%s1 + $0xc] sm:$0xf]
    %v77 = vld [vmem:[%s1 + $0x10] sm:$0xf]
    %v78 = vld [vmem:[%s1 + $0x14] sm:$0xf]
    %v79 = vld [vmem:[%s1 + $0x18] sm:$0xf]
    %v80 = vld [vmem:[%s1 + $0x1c] sm:$0xf]
    %v81 = vld [vmem:[%s1 + $0x20] sm:$0xf]
    %v82 = vld [vmem:[%s1 + $0x24] sm:$0xf]
    %v83 = vld [vmem:[%s1 + $0x28] sm:$0xf]
    %v84 = vld [vmem:[%s1 + $0x2c] sm:$0xf]
    %v85 = vld [vmem:[%s1 + $0x30] sm:$0xf]
    %v86 = vld [vmem:[%s1 + $0x34] sm:$0xf]
    %v87 = vld [vmem:[%s1 + $0x38] sm:$0xf]
    %v88 = vld [vmem:[%s1 + $0x3c] sm:$0xf]
    %v105 = vunpack.c.l.b16 %v57
    %v106 = vunpack.c.l.b16 %v58
    %v107 = vunpack.c.l.b16 %v59
    %v108 = vunpack.c.l.b16 %v60
    %v109 = vunpack.c.l.b16 %v61
    %v110 = vunpack.c.l.b16 %v62
    %v111 = vunpack.c.l.b16 %v63
    %v112 = vunpack.c.l.b16 %v64
    %v113 = vunpack.c.l.b16 %v65
    %v114 = vunpack.c.l.b16 %v66
    %v115 = vunpack.c.l.b16 %v67
    %v116 = vunpack.c.l.b16 %v68
    %v117 = vunpack.c.l.b16 %v69
    %v118 = vunpack.c.l.b16 %v70
    %v119 = vunpack.c.l.b16 %v71
    %v120 = vunpack.c.l.b16 %v72
    %v121 = vpack.c.b16 %v106, %v105
    %v122 = vpack.c.b16 %v108, %v107
    %v123 = vpack.c.b16 %v110, %v109
    %v124 = vpack.c.b16 %v112, %v111
    %v125 = vpack.c.b16 %v114, %v113
    %v126 = vpack.c.b16 %v116, %v115
    %v127 = vpack.c.b16 %v118, %v117
    %v128 = vpack.c.b16 %v120, %v119
    %v153 = vunpack.c.l.b16 %v73
    %v154 = vunpack.c.l.b16 %v74
    %v155 = vunpack.c.l.b16 %v75
    %v156 = vunpack.c.l.b16 %v76
    %v157 = vunpack.c.l.b16 %v77
    %v158 = vunpack.c.l.b16 %v78
    %v159 = vunpack.c.l.b16 %v79
    %v160 = vunpack.c.l.b16 %v80
    %v161 = vunpack.c.l.b16 %v81
    %v162 = vunpack.c.l.b16 %v82
    %v163 = vunpack.c.l.b16 %v83
    %v164 = vunpack.c.l.b16 %v84
    %v165 = vunpack.c.l.b16 %v85
    %v166 = vunpack.c.l.b16 %v86
    %v167 = vunpack.c.l.b16 %v87
    %v168 = vunpack.c.l.b16 %v88
    %v169 = vpack.c.b16 %v154, %v153
    %v170 = vpack.c.b16 %v156, %v155
    %v171 = vpack.c.b16 %v158, %v157
    %v172 = vpack.c.b16 %v160, %v159
    %v173 = vpack.c.b16 %v162, %v161
    %v174 = vpack.c.b16 %v164, %v163
    %v175 = vpack.c.b16 %v166, %v165
    %v176 = vpack.c.b16 %v168, %v167
    %185 = vmatpush.bf16.msra.mxu0 %v176
    %186 = vmatpush.bf16.msra.mxu0 %v175
    %187 = vmatpush.bf16.msra.mxu0 %v174
    %188 = vmatpush.bf16.msra.mxu0 %v173
    %189 = vmatpush.bf16.msra.mxu0 %v172
    %190 = vmatpush.bf16.msra.mxu0 %v171
    %191 = vmatpush.bf16.msra.mxu0 %v170
    %192 = vmatpush.bf16.msra.mxu0 %v169
    %193 = vmatmul.bf16.gmra.mxu0 %v121
    %v194 = vpop.f32.mrf.mxu0
    %v195 = vadd.f32 0.0, %v194
    %v196 = vpop.f32.mrf.mxu0
    %v197 = vadd.f32 0.0, %v196
    %198 = vmatmul.bf16.gmra.mxu0 %v122
    %v199 = vpop.f32.mrf.mxu0
    %v200 = vadd.f32 0.0, %v199
    %v201 = vpop.f32.mrf.mxu0
    %v202 = vadd.f32 0.0, %v201
    %203 = vmatmul.bf16.gmra.mxu0 %v123
    %v204 = vpop.f32.mrf.mxu0
    %v205 = vadd.f32 0.0, %v204
    %v206 = vpop.f32.mrf.mxu0
    %v207 = vadd.f32 0.0, %v206
    %208 = vmatmul.bf16.gmra.mxu0 %v124
    %v209 = vpop.f32.mrf.mxu0
    %v210 = vadd.f32 0.0, %v209
    %v211 = vpop.f32.mrf.mxu0
    %v212 = vadd.f32 0.0, %v211
    %213 = vmatmul.bf16.gmra.mxu0 %v125
    %v214 = vpop.f32.mrf.mxu0
    %v215 = vadd.f32 0.0, %v214
    %v216 = vpop.f32.mrf.mxu0
    %v217 = vadd.f32 0.0, %v216
    %218 = vmatmul.bf16.gmra.mxu0 %v126
    %v219 = vpop.f32.mrf.mxu0
    %v220 = vadd.f32 0.0, %v219
    %v221 = vpop.f32.mrf.mxu0
    %v222 = vadd.f32 0.0, %v221
    %223 = vmatmul.bf16.gmra.mxu0 %v127
    %v224 = vpop.f32.mrf.mxu0
    %v225 = vadd.f32 0.0, %v224
    %v226 = vpop.f32.mrf.mxu0
    %v227 = vadd.f32 0.0, %v226
    %228 = vmatmul.bf16.gmra.mxu0 %v128
    %v229 = vpop.f32.mrf.mxu0
    %v230 = vadd.f32 0.0, %v229
    %v231 = vpop.f32.mrf.mxu0
    %v232 = vadd.f32 0.0, %v231
    %233 = vdwg.mxu0
    %v234 = vadd.f32 %v41, %v195
    %v235 = vadd.f32 %v42, %v197
    %v236 = vadd.f32 %v43, %v200
    %v237 = vadd.f32 %v44, %v202
    %v238 = vadd.f32 %v45, %v205
    %v239 = vadd.f32 %v46, %v207
    %v240 = vadd.f32 %v47, %v210
    %v241 = vadd.f32 %v48, %v212
    %v242 = vadd.f32 %v49, %v215
    %v243 = vadd.f32 %v50, %v217
    %v244 = vadd.f32 %v51, %v220
    %v245 = vadd.f32 %v52, %v222
    %v246 = vadd.f32 %v53, %v225
    %v247 = vadd.f32 %v54, %v227
    %v248 = vadd.f32 %v55, %v230
    %v249 = vadd.f32 %v56, %v232
    %250 = vst [vmem:[#allocation2] sm:$0xff] %v234
    %251 = vst [vmem:[#allocation2 + $0x8] sm:$0xff] %v235
    %252 = vst [vmem:[#allocation2 + $0x10] sm:$0xff] %v236
    %253 = vst [vmem:[#allocation2 + $0x18] sm:$0xff] %v237
    %254 = vst [vmem:[#allocation2 + $0x20] sm:$0xff] %v238
    %255 = vst [vmem:[#allocation2 + $0x28] sm:$0xff] %v239
    %256 = vst [vmem:[#allocation2 + $0x30] sm:$0xff] %v240
    %257 = vst [vmem:[#allocation2 + $0x38] sm:$0xff] %v241
    %258 = vst [vmem:[#allocation2 + $0x40] sm:$0xff] %v242
    %259 = vst [vmem:[#allocation2 + $0x48] sm:$0xff] %v243
    %260 = vst [vmem:[#allocation2 + $0x50] sm:$0xff] %v244
    %261 = vst [vmem:[#allocation2 + $0x58] sm:$0xff] %v245
    %262 = vst [vmem:[#allocation2 + $0x60] sm:$0xff] %v246
    %263 = vst [vmem:[#allocation2 + $0x68] sm:$0xff] %v247
    %264 = vst [vmem:[#allocation2 + $0x70] sm:$0xff] %v248
    %265 = vst [vmem:[#allocation2 + $0x78] sm:$0xff] %v249
    // Predicated region
    $region26: #{_lambda_.7} parent=1 // pred_check
      %p266 = pneg %p21
    $region27: #{_lambda_.7} parent=1 // pred_check_branch
      %268 = sbr.rel (%p266) target = $region29
    $region28: #{_lambda_.7} parent=1 // pred_region
      %v269 = vld [vmem:[#allocation2] sm:$0xff]
      %v270 = vld [vmem:[#allocation2 + $0x8] sm:$0xff]
      %v271 = vld [vmem:[#allocation2 + $0x10] sm:$0xff]
      %v272 = vld [vmem:[#allocation2 + $0x18] sm:$0xff]
      %v273 = vld [vmem:[#allocation2 + $0x20] sm:$0xff]
      %v274 = vld [vmem:[#allocation2 + $0x28] sm:$0xff]
      %v275 = vld [vmem:[#allocation2 + $0x30] sm:$0xff]
      %v276 = vld [vmem:[#allocation2 + $0x38] sm:$0xff]
      %v277 = vld [vmem:[#allocation2 + $0x40] sm:$0xff]
      %v278 = vld [vmem:[#allocation2 + $0x48] sm:$0xff]
      %v279 = vld [vmem:[#allocation2 + $0x50] sm:$0xff]
      %v280 = vld [vmem:[#allocation2 + $0x58] sm:$0xff]
      %v281 = vld [vmem:[#allocation2 + $0x60] sm:$0xff]
      %v282 = vld [vmem:[#allocation2 + $0x68] sm:$0xff]
      %v283 = vld [vmem:[#allocation2 + $0x70] sm:$0xff]
      %v284 = vld [vmem:[#allocation2 + $0x78] sm:$0xff]
      %v285 = vld [vmem:[%s2] sm:$0x1]
      %v287 = vperm.slane %v285, 0
      %v289 = vmul.f32 %v269, %v287
      %v290 = vmul.f32 %v270, %v287
      %v291 = vmul.f32 %v271, %v287
      %v292 = vmul.f32 %v272, %v287
      %v293 = vmul.f32 %v273, %v287
      %v294 = vmul.f32 %v274, %v287
      %v295 = vmul.f32 %v275, %v287
      %v296 = vmul.f32 %v276, %v287
      %v297 = vmul.f32 %v277, %v287
      %v298 = vmul.f32 %v278, %v287
      %v299 = vmul.f32 %v279, %v287
      %v300 = vmul.f32 %v280, %v287
      %v301 = vmul.f32 %v281, %v287
      %v302 = vmul.f32 %v282, %v287
      %v303 = vmul.f32 %v283, %v287
      %v304 = vmul.f32 %v284, %v287
      %v305 = vld [vmem:[%s3] sm:$0x1]
      %v307 = vperm.slane %v305, 0
      %v309 = vadd.f32 %v289, %v307
      %v310 = vadd.f32 %v290, %v307
      %v311 = vadd.f32 %v291, %v307
      %v312 = vadd.f32 %v292, %v307
      %v313 = vadd.f32 %v293, %v307
      %v314 = vadd.f32 %v294, %v307
      %v315 = vadd.f32 %v295, %v307
      %v316 = vadd.f32 %v296, %v307
      %v317 = vadd.f32 %v297, %v307
      %v318 = vadd.f32 %v298, %v307
      %v319 = vadd.f32 %v299, %v307
      %v320 = vadd.f32 %v300, %v307
      %v321 = vadd.f32 %v301, %v307
      %v322 = vadd.f32 %v302, %v307
      %v323 = vadd.f32 %v303, %v307
      %v324 = vadd.f32 %v304, %v307
      %v325 = vmax.f32 %v309, 0.0
      %v326 = vmax.f32 %v310, 0.0
      %v327 = vmax.f32 %v311, 0.0
      %v328 = vmax.f32 %v312, 0.0
      %v329 = vmax.f32 %v313, 0.0
      %v330 = vmax.f32 %v314, 0.0
      %v331 = vmax.f32 %v315, 0.0
      %v332 = vmax.f32 %v316, 0.0
      %v333 = vmax.f32 %v317, 0.0
      %v334 = vmax.f32 %v318, 0.0
      %v335 = vmax.f32 %v319, 0.0
      %v336 = vmax.f32 %v320, 0.0
      %v337 = vmax.f32 %v321, 0.0
      %v338 = vmax.f32 %v322, 0.0
      %v339 = vmax.f32 %v323, 0.0
      %v340 = vmax.f32 %v324, 0.0
      %v341 = vld [vmem:[%s4] sm:$0xff]
      %v342 = vld [vmem:[%s4 + $0x8] sm:$0xff]
      %v343 = vld [vmem:[%s4 + $0x10] sm:$0xff]
      %v344 = vld [vmem:[%s4 + $0x18] sm:$0xff]
      %v345 = vld [vmem:[%s4 + $0x20] sm:$0xff]
      %v346 = vld [vmem:[%s4 + $0x28] sm:$0xff]
      %v347 = vld [vmem:[%s4 + $0x30] sm:$0xff]
      %v348 = vld [vmem:[%s4 + $0x38] sm:$0xff]
      %v349 = vld [vmem:[%s4 + $0x40] sm:$0xff]
      %v350 = vld [vmem:[%s4 + $0x48] sm:$0xff]
      %v351 = vld [vmem:[%s4 + $0x50] sm:$0xff]
      %v352 = vld [vmem:[%s4 + $0x58] sm:$0xff]
      %v353 = vld [vmem:[%s4 + $0x60] sm:$0xff]
      %v354 = vld [vmem:[%s4 + $0x68] sm:$0xff]
      %v355 = vld [vmem:[%s4 + $0x70] sm:$0xff]
      %v356 = vld [vmem:[%s4 + $0x78] sm:$0xff]
      %v357 = vadd.f32 %v325, %v341
      %v358 = vadd.f32 %v326, %v342
      %v359 = vadd.f32 %v327, %v343
      %v360 = vadd.f32 %v328, %v344
      %v361 = vadd.f32 %v329, %v345
      %v362 = vadd.f32 %v330, %v346
      %v363 = vadd.f32 %v331, %v347
      %v364 = vadd.f32 %v332, %v348
      %v365 = vadd.f32 %v333, %v349
      %v366 = vadd.f32 %v334, %v350
      %v367 = vadd.f32 %v335, %v351
      %v368 = vadd.f32 %v336, %v352
      %v369 = vadd.f32 %v337, %v353
      %v370 = vadd.f32 %v338, %v354
      %v371 = vadd.f32 %v339, %v355
      %v372 = vadd.f32 %v340, %v356
      %v373 = vmax.f32 %v357, 0.0
      %v374 = vmax.f32 %v358, 0.0
      %v375 = vmax.f32 %v359, 0.0
      %v376 = vmax.f32 %v360, 0.0
      %v377 = vmax.f32 %v361, 0.0
      %v378 = vmax.f32 %v362, 0.0
      %v379 = vmax.f32 %v363, 0.0
      %v380 = vmax.f32 %v364, 0.0
      %v381 = vmax.f32 %v365, 0.0
      %v382 = vmax.f32 %v366, 0.0
      %v383 = vmax.f32 %v367, 0.0
      %v384 = vmax.f32 %v368, 0.0
      %v385 = vmax.f32 %v369, 0.0
      %v386 = vmax.f32 %v370, 0.0
      %v387 = vmax.f32 %v371, 0.0
      %v388 = vmax.f32 %v372, 0.0
      %389 = vst [vmem:[#allocation3] sm:$0xff] %v373
      %390 = vst [vmem:[#allocation3 + $0x8] sm:$0xff] %v374
      %391 = vst [vmem:[#allocation3 + $0x10] sm:$0xff] %v375
      %392 = vst [vmem:[#allocation3 + $0x18] sm:$0xff] %v376
      %393 = vst [vmem:[#allocation3 + $0x20] sm:$0xff] %v377
      %394 = vst [vmem:[#allocation3 + $0x28] sm:$0xff] %v378
      %395 = vst [vmem:[#allocation3 + $0x30] sm:$0xff] %v379
      %396 = vst [vmem:[#allocation3 + $0x38] sm:$0xff] %v380
      %397 = vst [vmem:[#allocation3 + $0x40] sm:$0xff] %v381
      %398 = vst [vmem:[#allocation3 + $0x48] sm:$0xff] %v382
      %399 = vst [vmem:[#allocation3 + $0x50] sm:$0xff] %v383
      %400 = vst [vmem:[#allocation3 + $0x58] sm:$0xff] %v384
      %401 = vst [vmem:[#allocation3 + $0x60] sm:$0xff] %v385
      %402 = vst [vmem:[#allocation3 + $0x68] sm:$0xff] %v386
      %403 = vst [vmem:[#allocation3 + $0x70] sm:$0xff] %v387
      %404 = vst [vmem:[#allocation3 + $0x78] sm:$0xff] %v388
    $region29: #{_lambda_.7} parent=1 // pred_fallthru
      _
    // Predicated region
    $region30: #{_lambda_.7} parent=1 // pred_check
      _
    $region31: #{_lambda_.7} parent=1 // pred_check_branch
      %406 = sbr.rel (0) target = $region33
    $region32: #{_lambda_.7} parent=1 // pred_region
      %408 = vsyncadd [#allocation4], 0
      %s409 = sshll.u32 [#allocation3], 4
      %s410 = int_to_ptr.vmem [resolvable:$true] %s409
      %s411 = sshll.u32 %s5, 4
      %s412 = int_to_ptr.hbm [resolvable:$true] %s411
      %417 = dma.vmem_to_hbm [thread:$0]  %s410, 2048, %s412, [#allocation4], 128, 128, 8
    $region33: #{_lambda_.7} parent=1 // pred_fallthru
      _
    // Predicated region
    $region34: #{_lambda_.7} parent=1 // pred_check
      _
    $region35: #{_lambda_.7} parent=1 // pred_check_branch
      %419 = sbr.rel (0) target = $region37
    $region36: #{_lambda_.7} parent=1 // pred_region
      %421 = dma.done [#allocation4], 2048
    $region37: #{_lambda_.7} parent=1 // pred_fallthru
      _
    %422 = vsyncpa [#allocation4], 1

// kernel: _lambda_.6
$region0: #{_lambda_.6}
  #allocation0 [shape = 'u32[]', space=smem, size = 0x4, offset = 0x4, fixed_abs, tag = 'smem constant byte address 0x4 - core index']
  #allocation1 [shape = 'u32[72,128]{1,0:T(1,128)}', space=vmem, size = 0x9000, scoped, tag = 'internal scratch']
  #allocation2 [shape = 'f32[128,128]{1,0:T(8,128)}', space=vmem, size = 0x10000, scoped, tag = 'scratch operand']
  %s0 = inlined_call_operand.vmem [shape: bf16[128,128], index: 0, kind: input, shape index: {}]
  %s1 = inlined_call_operand.vmem [shape: bf16[128,128], index: 1, kind: input, shape index: {}]
  %s2 = inlined_call_operand.vmem [shape: f32[1,128], index: 2, kind: input, shape index: {}]
  %s3 = inlined_call_operand.vmem [shape: f32[1,128], index: 3, kind: input, shape index: {}]
  %s4 = inlined_call_operand.vmem [shape: f32[128,128], index: 4, kind: output, shape index: {}]
  %s5 = sld [smem:[#allocation0]]
  $region34: #{_lambda_.6} parent=0
    _
  %s7 = ssub.s32 1, %s5
  %s8 = scalar_select 0, %s7, %s5
  // Predicated region
  $region2: #{_lambda_.6} parent=0 // pred_check
    _
  $region3: #{_lambda_.6} parent=0 // pred_check_branch
    %10 = sbr.rel (0) target = $region5
  $region4: #{_lambda_.6} parent=0 // pred_region
    _
  $region5: #{_lambda_.6} parent=0 // pred_fallthru
    _
  // Predicated region
  $region6: #{_lambda_.6} parent=0 // pred_check
    _
  $region7: #{_lambda_.6} parent=0 // pred_check_branch
    %12 = sbr.rel (0) target = $region9
  $region8: #{_lambda_.6} parent=0 // pred_region
    _
  $region9: #{_lambda_.6} parent=0 // pred_fallthru
    _
  // Predicated region
  $region10: #{_lambda_.6} parent=0 // pred_check
    _
  $region11: #{_lambda_.6} parent=0 // pred_check_branch
    %14 = sbr.rel (0) target = $region13
  $region12: #{_lambda_.6} parent=0 // pred_region
    _
  $region13: #{_lambda_.6} parent=0 // pred_fallthru
    _
  // Predicated region
  $region14: #{_lambda_.6} parent=0 // pred_check
    _
  $region15: #{_lambda_.6} parent=0 // pred_check_branch
    %16 = sbr.rel (0) target = $region17
  $region16: #{_lambda_.6} parent=0 // pred_region
    _
  $region17: #{_lambda_.6} parent=0 // pred_fallthru
    _
  %p17 = scmp.eq.s32.totalorder 0, 0
  // Predicated region
  $region18: #{_lambda_.6} parent=0 // pred_check
    %p18 = pneg %p17
  $region19: #{_lambda_.6} parent=0 // pred_check_branch
    %20 = sbr.rel (%p18) target = $region21
  $region20: #{_lambda_.6} parent=0 // pred_region
    %21 = vst [vmem:[#allocation2] sm:$0xff] 0.0
    %22 = vst [vmem:[#allocation2 + $0x8] sm:$0xff] 0.0
    %23 = vst [vmem:[#allocation2 + $0x10] sm:$0xff] 0.0
    %24 = vst [vmem:[#allocation2 + $0x18] sm:$0xff] 0.0
    %25 = vst [vmem:[#allocation2 + $0x20] sm:$0xff] 0.0
    %26 = vst [vmem:[#allocation2 + $0x28] sm:$0xff] 0.0
    %27 = vst [vmem:[#allocation2 + $0x30] sm:$0xff] 0.0
    %28 = vst [vmem:[#allocation2 + $0x38] sm:$0xff] 0.0
    %29 = vst [vmem:[#allocation2 + $0x40] sm:$0xff] 0.0
    %30 = vst [vmem:[#allocation2 + $0x48] sm:$0xff] 0.0
    %31 = vst [vmem:[#allocation2 + $0x50] sm:$0xff] 0.0
    %32 = vst [vmem:[#allocation2 + $0x58] sm:$0xff] 0.0
    %33 = vst [vmem:[#allocation2 + $0x60] sm:$0xff] 0.0
    %34 = vst [vmem:[#allocation2 + $0x68] sm:$0xff] 0.0
    %35 = vst [vmem:[#allocation2 + $0x70] sm:$0xff] 0.0
    %36 = vst [vmem:[#allocation2 + $0x78] sm:$0xff] 0.0
  $region21: #{_lambda_.6} parent=0 // pred_fallthru
    _
  %v37 = vld [vmem:[#allocation2] sm:$0xff]
  %v38 = vld [vmem:[#allocation2 + $0x8] sm:$0xff]
  %v39 = vld [vmem:[#allocation2 + $0x10] sm:$0xff]
  %v40 = vld [vmem:[#allocation2 + $0x18] sm:$0xff]
  %v41 = vld [vmem:[#allocation2 + $0x20] sm:$0xff]
  %v42 = vld [vmem:[#allocation2 + $0x28] sm:$0xff]
  %v43 = vld [vmem:[#allocation2 + $0x30] sm:$0xff]
  %v44 = vld [vmem:[#allocation2 + $0x38] sm:$0xff]
  %v45 = vld [vmem:[#allocation2 + $0x40] sm:$0xff]
  %v46 = vld [vmem:[#allocation2 + $0x48] sm:$0xff]
  %v47 = vld [vmem:[#allocation2 + $0x50] sm:$0xff]
  %v48 = vld [vmem:[#allocation2 + $0x58] sm:$0xff]
  %v49 = vld [vmem:[#allocation2 + $0x60] sm:$0xff]
  %v50 = vld [vmem:[#allocation2 + $0x68] sm:$0xff]
  %v51 = vld [vmem:[#allocation2 + $0x70] sm:$0xff]
  %v52 = vld [vmem:[#allocation2 + $0x78] sm:$0xff]
  %v53 = vld [vmem:[%s0] sm:$0xf]
  %v54 = vld [vmem:[%s0 + $0x4] sm:$0xf]
  %v55 = vld [vmem:[%s0 + $0x8] sm:$0xf]
  %v56 = vld [vmem:[%s0 + $0xc] sm:$0xf]
  %v57 = vld [vmem:[%s0 + $0x10] sm:$0xf]
  %v58 = vld [vmem:[%s0 + $0x14] sm:$0xf]
  %v59 = vld [vmem:[%s0 + $0x18] sm:$0xf]
  %v60 = vld [vmem:[%s0 + $0x1c] sm:$0xf]
  %v61 = vld [vmem:[%s0 + $0x20] sm:$0xf]
  %v62 = vld [vmem:[%s0 + $0x24] sm:$0xf]
  %v63 = vld [vmem:[%s0 + $0x28] sm:$0xf]
  %v64 = vld [vmem:[%s0 + $0x2c] sm:$0xf]
  %v65 = vld [vmem:[%s0 + $0x30] sm:$0xf]
  %v66 = vld [vmem:[%s0 + $0x34] sm:$0xf]
  %v67 = vld [vmem:[%s0 + $0x38] sm:$0xf]
  %v68 = vld [vmem:[%s0 + $0x3c] sm:$0xf]
  %v69 = vld [vmem:[%s1] sm:$0xf]
  %v70 = vld [vmem:[%s1 + $0x4] sm:$0xf]
  %v71 = vld [vmem:[%s1 + $0x8] sm:$0xf]
  %v72 = vld [vmem:[%s1 + $0xc] sm:$0xf]
  %v73 = vld [vmem:[%s1 + $0x10] sm:$0xf]
  %v74 = vld [vmem:[%s1 + $0x14] sm:$0xf]
  %v75 = vld [vmem:[%s1 + $0x18] sm:$0xf]
  %v76 = vld [vmem:[%s1 + $0x1c] sm:$0xf]
  %v77 = vld [vmem:[%s1 + $0x20] sm:$0xf]
  %v78 = vld [vmem:[%s1 + $0x24] sm:$0xf]
  %v79 = vld [vmem:[%s1 + $0x28] sm:$0xf]
  %v80 = vld [vmem:[%s1 + $0x2c] sm:$0xf]
  %v81 = vld [vmem:[%s1 + $0x30] sm:$0xf]
  %v82 = vld [vmem:[%s1 + $0x34] sm:$0xf]
  %v83 = vld [vmem:[%s1 + $0x38] sm:$0xf]
  %v84 = vld [vmem:[%s1 + $0x3c] sm:$0xf]
  %v101 = vunpack.c.l.b16 %v53
  %v102 = vunpack.c.l.b16 %v54
  %v103 = vunpack.c.l.b16 %v55
  %v104 = vunpack.c.l.b16 %v56
  %v105 = vunpack.c.l.b16 %v57
  %v106 = vunpack.c.l.b16 %v58
  %v107 = vunpack.c.l.b16 %v59
  %v108 = vunpack.c.l.b16 %v60
  %v109 = vunpack.c.l.b16 %v61
  %v110 = vunpack.c.l.b16 %v62
  %v111 = vunpack.c.l.b16 %v63
  %v112 = vunpack.c.l.b16 %v64
  %v113 = vunpack.c.l.b16 %v65
  %v114 = vunpack.c.l.b16 %v66
  %v115 = vunpack.c.l.b16 %v67
  %v116 = vunpack.c.l.b16 %v68
  %v117 = vpack.c.b16 %v102, %v101
  %v118 = vpack.c.b16 %v104, %v103
  %v119 = vpack.c.b16 %v106, %v105
  %v120 = vpack.c.b16 %v108, %v107
  %v121 = vpack.c.b16 %v110, %v109
  %v122 = vpack.c.b16 %v112, %v111
  %v123 = vpack.c.b16 %v114, %v113
  %v124 = vpack.c.b16 %v116, %v115
  %v149 = vunpack.c.l.b16 %v69
  %v150 = vunpack.c.l.b16 %v70
  %v151 = vunpack.c.l.b16 %v71
  %v152 = vunpack.c.l.b16 %v72
  %v153 = vunpack.c.l.b16 %v73
  %v154 = vunpack.c.l.b16 %v74
  %v155 = vunpack.c.l.b16 %v75
  %v156 = vunpack.c.l.b16 %v76
  %v157 = vunpack.c.l.b16 %v77
  %v158 = vunpack.c.l.b16 %v78
  %v159 = vunpack.c.l.b16 %v79
  %v160 = vunpack.c.l.b16 %v80
  %v161 = vunpack.c.l.b16 %v81
  %v162 = vunpack.c.l.b16 %v82
  %v163 = vunpack.c.l.b16 %v83
  %v164 = vunpack.c.l.b16 %v84
  %v165 = vpack.c.b16 %v150, %v149
  %v166 = vpack.c.b16 %v152, %v151
  %v167 = vpack.c.b16 %v154, %v153
  %v168 = vpack.c.b16 %v156, %v155
  %v169 = vpack.c.b16 %v158, %v157
  %v170 = vpack.c.b16 %v160, %v159
  %v171 = vpack.c.b16 %v162, %v161
  %v172 = vpack.c.b16 %v164, %v163
  %181 = vmatpush.bf16.msra.mxu0 %v172
  %182 = vmatpush.bf16.msra.mxu0 %v171
  %183 = vmatpush.bf16.msra.mxu0 %v170
  %184 = vmatpush.bf16.msra.mxu0 %v169
  %185 = vmatpush.bf16.msra.mxu0 %v168
  %186 = vmatpush.bf16.msra.mxu0 %v167
  %187 = vmatpush.bf16.msra.mxu0 %v166
  %188 = vmatpush.bf16.msra.mxu0 %v165
  %189 = vmatmul.bf16.gmra.mxu0 %v117
  %v190 = vpop.f32.mrf.mxu0
  %v191 = vadd.f32 0.0, %v190
  %v192 = vpop.f32.mrf.mxu0
  %v193 = vadd.f32 0.0, %v192
  %194 = vmatmul.bf16.gmra.mxu0 %v118
  %v195 = vpop.f32.mrf.mxu0
  %v196 = vadd.f32 0.0, %v195
  %v197 = vpop.f32.mrf.mxu0
  %v198 = vadd.f32 0.0, %v197
  %199 = vmatmul.bf16.gmra.mxu0 %v119
  %v200 = vpop.f32.mrf.mxu0
  %v201 = vadd.f32 0.0, %v200
  %v202 = vpop.f32.mrf.mxu0
  %v203 = vadd.f32 0.0, %v202
  %204 = vmatmul.bf16.gmra.mxu0 %v120
  %v205 = vpop.f32.mrf.mxu0
  %v206 = vadd.f32 0.0, %v205
  %v207 = vpop.f32.mrf.mxu0
  %v208 = vadd.f32 0.0, %v207
  %209 = vmatmul.bf16.gmra.mxu0 %v121
  %v210 = vpop.f32.mrf.mxu0
  %v211 = vadd.f32 0.0, %v210
  %v212 = vpop.f32.mrf.mxu0
  %v213 = vadd.f32 0.0, %v212
  %214 = vmatmul.bf16.gmra.mxu0 %v122
  %v215 = vpop.f32.mrf.mxu0
  %v216 = vadd.f32 0.0, %v215
  %v217 = vpop.f32.mrf.mxu0
  %v218 = vadd.f32 0.0, %v217
  %219 = vmatmul.bf16.gmra.mxu0 %v123
  %v220 = vpop.f32.mrf.mxu0
  %v221 = vadd.f32 0.0, %v220
  %v222 = vpop.f32.mrf.mxu0
  %v223 = vadd.f32 0.0, %v222
  %224 = vmatmul.bf16.gmra.mxu0 %v124
  %v225 = vpop.f32.mrf.mxu0
  %v226 = vadd.f32 0.0, %v225
  %v227 = vpop.f32.mrf.mxu0
  %v228 = vadd.f32 0.0, %v227
  %229 = vdwg.mxu0
  %v230 = vadd.f32 %v37, %v191
  %v231 = vadd.f32 %v38, %v193
  %v232 = vadd.f32 %v39, %v196
  %v233 = vadd.f32 %v40, %v198
  %v234 = vadd.f32 %v41, %v201
  %v235 = vadd.f32 %v42, %v203
  %v236 = vadd.f32 %v43, %v206
  %v237 = vadd.f32 %v44, %v208
  %v238 = vadd.f32 %v45, %v211
  %v239 = vadd.f32 %v46, %v213
  %v240 = vadd.f32 %v47, %v216
  %v241 = vadd.f32 %v48, %v218
  %v242 = vadd.f32 %v49, %v221
  %v243 = vadd.f32 %v50, %v223
  %v244 = vadd.f32 %v51, %v226
  %v245 = vadd.f32 %v52, %v228
  %246 = vst [vmem:[#allocation2] sm:$0xff] %v230
  %247 = vst [vmem:[#allocation2 + $0x8] sm:$0xff] %v231
  %248 = vst [vmem:[#allocation2 + $0x10] sm:$0xff] %v232
  %249 = vst [vmem:[#allocation2 + $0x18] sm:$0xff] %v233
  %250 = vst [vmem:[#allocation2 + $0x20] sm:$0xff] %v234
  %251 = vst [vmem:[#allocation2 + $0x28] sm:$0xff] %v235
  %252 = vst [vmem:[#allocation2 + $0x30] sm:$0xff] %v236
  %253 = vst [vmem:[#allocation2 + $0x38] sm:$0xff] %v237
  %254 = vst [vmem:[#allocation2 + $0x40] sm:$0xff] %v238
  %255 = vst [vmem:[#allocation2 + $0x48] sm:$0xff] %v239
  %256 = vst [vmem:[#allocation2 + $0x50] sm:$0xff] %v240
  %257 = vst [vmem:[#allocation2 + $0x58] sm:$0xff] %v241
  %258 = vst [vmem:[#allocation2 + $0x60] sm:$0xff] %v242
  %259 = vst [vmem:[#allocation2 + $0x68] sm:$0xff] %v243
  %260 = vst [vmem:[#allocation2 + $0x70] sm:$0xff] %v244
  %261 = vst [vmem:[#allocation2 + $0x78] sm:$0xff] %v245
  // Predicated region
  $region22: #{_lambda_.6} parent=0 // pred_check
    %p262 = pneg %p17
  $region23: #{_lambda_.6} parent=0 // pred_check_branch
    %264 = sbr.rel (%p262) target = $region25
  $region24: #{_lambda_.6} parent=0 // pred_region
    %v265 = vld [vmem:[#allocation2] sm:$0xff]
    %v266 = vld [vmem:[#allocation2 + $0x8] sm:$0xff]
    %v267 = vld [vmem:[#allocation2 + $0x10] sm:$0xff]
    %v268 = vld [vmem:[#allocation2 + $0x18] sm:$0xff]
    %v269 = vld [vmem:[#allocation2 + $0x20] sm:$0xff]
    %v270 = vld [vmem:[#allocation2 + $0x28] sm:$0xff]
    %v271 = vld [vmem:[#allocation2 + $0x30] sm:$0xff]
    %v272 = vld [vmem:[#allocation2 + $0x38] sm:$0xff]
    %v273 = vld [vmem:[#allocation2 + $0x40] sm:$0xff]
    %v274 = vld [vmem:[#allocation2 + $0x48] sm:$0xff]
    %v275 = vld [vmem:[#allocation2 + $0x50] sm:$0xff]
    %v276 = vld [vmem:[#allocation2 + $0x58] sm:$0xff]
    %v277 = vld [vmem:[#allocation2 + $0x60] sm:$0xff]
    %v278 = vld [vmem:[#allocation2 + $0x68] sm:$0xff]
    %v279 = vld [vmem:[#allocation2 + $0x70] sm:$0xff]
    %v280 = vld [vmem:[#allocation2 + $0x78] sm:$0xff]
    %v281 = vld [vmem:[%s2] sm:$0x1]
    %v283 = vperm.slane %v281, 0
    %v285 = vmul.f32 %v265, %v283
    %v286 = vmul.f32 %v266, %v283
    %v287 = vmul.f32 %v267, %v283
    %v288 = vmul.f32 %v268, %v283
    %v289 = vmul.f32 %v269, %v283
    %v290 = vmul.f32 %v270, %v283
    %v291 = vmul.f32 %v271, %v283
    %v292 = vmul.f32 %v272, %v283
    %v293 = vmul.f32 %v273, %v283
    %v294 = vmul.f32 %v274, %v283
    %v295 = vmul.f32 %v275, %v283
    %v296 = vmul.f32 %v276, %v283
    %v297 = vmul.f32 %v277, %v283
    %v298 = vmul.f32 %v278, %v283
    %v299 = vmul.f32 %v279, %v283
    %v300 = vmul.f32 %v280, %v283
    %v301 = vld [vmem:[%s3] sm:$0x1]
    %v303 = vperm.slane %v301, 0
    %v305 = vadd.f32 %v285, %v303
    %v306 = vadd.f32 %v286, %v303
    %v307 = vadd.f32 %v287, %v303
    %v308 = vadd.f32 %v288, %v303
    %v309 = vadd.f32 %v289, %v303
    %v310 = vadd.f32 %v290, %v303
    %v311 = vadd.f32 %v291, %v303
    %v312 = vadd.f32 %v292, %v303
    %v313 = vadd.f32 %v293, %v303
    %v314 = vadd.f32 %v294, %v303
    %v315 = vadd.f32 %v295, %v303
    %v316 = vadd.f32 %v296, %v303
    %v317 = vadd.f32 %v297, %v303
    %v318 = vadd.f32 %v298, %v303
    %v319 = vadd.f32 %v299, %v303
    %v320 = vadd.f32 %v300, %v303
    %321 = vst [vmem:[%s4] sm:$0xff] %v305
    %322 = vst [vmem:[%s4 + $0x8] sm:$0xff] %v306
    %323 = vst [vmem:[%s4 + $0x10] sm:$0xff] %v307
    %324 = vst [vmem:[%s4 + $0x18] sm:$0xff] %v308
    %325 = vst [vmem:[%s4 + $0x20] sm:$0xff] %v309
    %326 = vst [vmem:[%s4 + $0x28] sm:$0xff] %v310
    %327 = vst [vmem:[%s4 + $0x30] sm:$0xff] %v311
    %328 = vst [vmem:[%s4 + $0x38] sm:$0xff] %v312
    %329 = vst [vmem:[%s4 + $0x40] sm:$0xff] %v313
    %330 = vst [vmem:[%s4 + $0x48] sm:$0xff] %v314
    %331 = vst [vmem:[%s4 + $0x50] sm:$0xff] %v315
    %332 = vst [vmem:[%s4 + $0x58] sm:$0xff] %v316
    %333 = vst [vmem:[%s4 + $0x60] sm:$0xff] %v317
    %334 = vst [vmem:[%s4 + $0x68] sm:$0xff] %v318
    %335 = vst [vmem:[%s4 + $0x70] sm:$0xff] %v319
    %336 = vst [vmem:[%s4 + $0x78] sm:$0xff] %v320
  $region25: #{_lambda_.6} parent=0 // pred_fallthru
    _
  // Predicated region
  $region26: #{_lambda_.6} parent=0 // pred_check
    _
  $region27: #{_lambda_.6} parent=0 // pred_check_branch
    %338 = sbr.rel (0) target = $region29
  $region28: #{_lambda_.6} parent=0 // pred_region
    _
  $region29: #{_lambda_.6} parent=0 // pred_fallthru
    _
  // Predicated region
  $region30: #{_lambda_.6} parent=0 // pred_check
    _
  $region31: #{_lambda_.6} parent=0 // pred_check_branch
    %340 = sbr.rel (0) target = $region33
  $region32: #{_lambda_.6} parent=0 // pred_region
    _
  $region33: #{_lambda_.6} parent=0 // pred_fallthru
    _

</llo_original>
